<compile_context>
chip_gen: v6e
topology: v6e:2x2x1
jax: 0.10.0
libtpu: 0.0.40
codegen_flags: <defaults>
</compile_context>

<pallas_src>
import jax
import jax.numpy as jnp
from jax.experimental import pallas as pl
from jax.experimental.pallas import tpu as pltpu


def _make_basic_conv_kernel(H, W, Cin, Cout, K, apply_relu):
    """Per grid step (one batch element, NCHW):

        y = (W2 @ im2col(zero_pad(x))) * scale + shift     # (Cout, H*W)
        y = relu(y)                                        # optional
    """
    P = K // 2

    def kernel(x_ref, w_ref, s_ref, b_ref, out_ref):
        x = x_ref[0].astype(jnp.float32)                       # (Cin, H, W)

        # Zero halo built in-register (value-level concat): no padded copy of
        # the input ever touches HBM.
        if P > 0:
            zr = jnp.zeros((Cin, P, W), jnp.float32)
            xp = jnp.concatenate([zr, x, zr], axis=1)          # (Cin, H+2P, W)
            zc = jnp.zeros((Cin, H + 2 * P, P), jnp.float32)
            xp = jnp.concatenate([zc, xp, zc], axis=2)         # (Cin, H+2P, W+2P)
        else:
            xp = x

        # im2col: all K*K taps stacked along the contraction axis so the whole
        # conv is a single MXU matmul.
        taps = []
        for dy in range(K):
            for dx in range(K):
                taps.append(xp[:, dy:dy + H, dx:dx + W])       # (Cin, H, W)
        patch = jnp.concatenate(taps, axis=0).reshape(K * K * Cin, H * W)

        acc = jnp.dot(w_ref[...], patch,
                      preferred_element_type=jnp.float32)      # (Cout, H*W) dense

        # Folded BN (eval) or conv bias: per-output-channel affine, broadcast
        # along the lane (spatial) axis.  Optional ReLU.
        y = acc * s_ref[...] + b_ref[...]
        if apply_relu:
            y = jnp.maximum(y, 0.0)

        out_ref[0] = y.astype(out_ref.dtype)                   # lane-dense store

    return kernel


def basic_conv_pallas(x, weight, *, bias=None, bn=None, act=False, eps=1e-5):
    """Forward of BasicConv(in_ch, out_ch, kernel, pad='zero', bn, act).

    x:      (N, Cin, H, W)     float32, NCHW (PyTorch layout)
    weight: (Cout, Cin, K, K)  PyTorch Conv2d weight layout (OIHW)
    bias:   (Cout,) or None    used when bn is None (Conv2d bias=not bn)
    bn:     dict with 'gamma', 'beta', 'mean', 'var' (eval-mode running stats)
    act:    apply ReLU
    Returns (N, Cout, H, W).
    """
    N, Cin, H, W = x.shape
    Cout, Cin_w, K, K2 = weight.shape
    assert Cin_w == Cin and K == K2 and K % 2 == 1
    HW = H * W

    # Weight as (Cout, K*K*Cin) with rows ordered (dy, dx, cin) to match the
    # kernel's im2col row order.
    w2 = jnp.transpose(weight, (0, 2, 3, 1)).reshape(Cout, K * K * Cin)
    w2 = w2.astype(jnp.float32)

    # Fold BN (eval) or conv bias into a per-channel scale/shift, shaped
    # (Cout, 1) so it broadcasts over the lane-dense spatial axis.
    if bn is not None:
        scale = bn["gamma"] / jnp.sqrt(bn["var"] + eps)
        shift = bn["beta"] - bn["mean"] * scale
    else:
        scale = jnp.ones((Cout,), jnp.float32)
        shift = bias if bias is not None else jnp.zeros((Cout,), jnp.float32)
    scale = scale.reshape(Cout, 1).astype(jnp.float32)
    shift = shift.reshape(Cout, 1).astype(jnp.float32)

    kernel = _make_basic_conv_kernel(H, W, Cin, Cout, K, act)

    out = pl.pallas_call(
        kernel,
        out_shape=jax.ShapeDtypeStruct((N, Cout, HW), jnp.float32),
        grid_spec=pltpu.PrefetchScalarGridSpec(
            num_scalar_prefetch=0,
            grid=(N,),
            in_specs=[
                pl.BlockSpec((1, Cin, H, W), lambda n: (n, 0, 0, 0)),
                pl.BlockSpec((Cout, K * K * Cin), lambda n: (0, 0)),
                pl.BlockSpec((Cout, 1), lambda n: (0, 0)),
                pl.BlockSpec((Cout, 1), lambda n: (0, 0)),
            ],
            out_specs=pl.BlockSpec((1, Cout, HW), lambda n: (n, 0, 0)),
        ),
        compiler_params=pltpu.CompilerParams(
            dimension_semantics=("parallel",)),
    )(x, w2, scale, shift)

    # Free reshape back to NCHW (no transpose needed: channels-first throughout).
    return out.reshape(N, Cout, H, W)


def _reference_jax(x, weight, bias, bn, act, eps=1e-5):
    """Pure-JAX NCHW reference for validation."""
    K = weight.shape[-1]
    p = K // 2
    y = jax.lax.conv_general_dilated(
        x, weight, window_strides=(1, 1), padding=((p, p), (p, p)),
        dimension_numbers=("NCHW", "OIHW", "NCHW"))
    if bn is not None:
        s = bn["gamma"] / jnp.sqrt(bn["var"] + eps)
        y = y * s[None, :, None, None] + (bn["beta"] - bn["mean"] * s)[None, :, None, None]
    elif bias is not None:
        y = y + bias[None, :, None, None]
    if act:
        y = jax.nn.relu(y)
    return y


if __name__ == "__main__":
    N, Cin, Cout, H, W, K = 2, 4, 8, 16, 16, 3

    key = jax.random.PRNGKey(0)
    ks = jax.random.split(key, 7)
    x = jax.random.normal(ks[0], (N, Cin, H, W), jnp.float32)
    weight = 0.2 * jax.random.normal(ks[1], (Cout, Cin, K, K), jnp.float32)
    bias = 0.1 * jax.random.normal(ks[2], (Cout,), jnp.float32)
    bn = {
        "gamma": 1.0 + 0.1 * jax.random.normal(ks[3], (Cout,), jnp.float32),
        "beta": 0.1 * jax.random.normal(ks[4], (Cout,), jnp.float32),
        "mean": 0.1 * jax.random.normal(ks[5], (Cout,), jnp.float32),
        "var": jnp.abs(1.0 + 0.1 * jax.random.normal(ks[6], (Cout,), jnp.float32)),
    }

    # BasicConv(Cin, Cout, 3, bn=True, act=True): pad -> conv(no bias) -> BN -> ReLU
    out1 = jax.block_until_ready(basic_conv_pallas(x, weight, bn=bn, act=True))
    ref1 = jax.block_until_ready(_reference_jax(x, weight, None, bn, True))
    assert out1.shape == (N, Cout, H, W)
    assert jnp.allclose(out1, ref1, atol=1e-4, rtol=1e-4), (
        f"max abs err {float(jnp.max(jnp.abs(out1 - ref1)))}")

    # BasicConv(Cin, Cout, 3) defaults (bn=False, act=False): pad -> conv(+bias)
    out2 = jax.block_until_ready(basic_conv_pallas(x, weight, bias=bias, act=False))
    ref2 = jax.block_until_ready(_reference_jax(x, weight, bias, None, False))
    assert jnp.allclose(out2, ref2, atol=1e-4, rtol=1e-4), (
        f"max abs err {float(jnp.max(jnp.abs(out2 - ref2)))}")

    print("KERNEL_OK")
</pallas_src>

<mosaic_0001>
module attributes {stable_mosaic.version = 11 : i64} {
  func.func @kernel(%arg0: i32, %arg1: memref<1x4x16x16xf32, #tpu.memory_space<vmem>>, %arg2: memref<8x36xf32, #tpu.memory_space<vmem>>, %arg3: memref<8x1xf32, #tpu.memory_space<vmem>>, %arg4: memref<8x1xf32, #tpu.memory_space<vmem>>, %arg5: memref<1x8x256xf32, #tpu.memory_space<vmem>>) attributes {dimension_semantics = [#tpu.dimension_semantics<parallel>], iteration_bounds = array<i64: 2>, scalar_prefetch = 0 : i64, scratch_operands = 0 : i64, tpu.core_type = #tpu.core_type<tc>, window_params = [{transform_indices = @transform_0, window_bounds = array<i64: 1, 4, 16, 16>}, {pipeline_mode = #tpu.pipeline_mode<synchronous>, transform_indices = @transform_1, window_bounds = array<i64: 8, 36>}, {pipeline_mode = #tpu.pipeline_mode<synchronous>, transform_indices = @transform_2, window_bounds = array<i64: 8, 1>}, {pipeline_mode = #tpu.pipeline_mode<synchronous>, transform_indices = @transform_3, window_bounds = array<i64: 8, 1>}, {transform_indices = @transform_4, window_bounds = array<i64: 1, 8, 256>}]} {
    %c0 = arith.constant 0 : index
    %c0_0 = arith.constant 0 : index
    %c0_1 = arith.constant 0 : index
    %c0_2 = arith.constant 0 : index
    %0 = vector.load %arg1[%c0, %c0_0, %c0_1, %c0_2] : memref<1x4x16x16xf32, #tpu.memory_space<vmem>>, vector<1x4x16x16xf32>
    %1 = vector.shape_cast %0 : vector<1x4x16x16xf32> to vector<4x16x16xf32>
    %cst = arith.constant 0.000000e+00 : f32
    %2 = vector.broadcast %cst : f32 to vector<4x1x16xf32>
    %3 = tpu.concatenate %2, %1, %2 in 1 : vector<4x1x16xf32>, vector<4x16x16xf32>, vector<4x1x16xf32> -> vector<4x18x16xf32>
    %cst_3 = arith.constant 0.000000e+00 : f32
    %4 = vector.broadcast %cst_3 : f32 to vector<4x18x1xf32>
    %5 = tpu.concatenate %4, %3, %4 in 2 : vector<4x18x1xf32>, vector<4x18x16xf32>, vector<4x18x1xf32> -> vector<4x18x18xf32>
    %6 = vector.extract_strided_slice %5 {offsets = [0, 0, 0], sizes = [4, 16, 16], strides = [1, 1, 1]} : vector<4x18x18xf32> to vector<4x16x16xf32>
    %7 = vector.extract_strided_slice %5 {offsets = [0, 0, 1], sizes = [4, 16, 16], strides = [1, 1, 1]} : vector<4x18x18xf32> to vector<4x16x16xf32>
    %8 = vector.extract_strided_slice %5 {offsets = [0, 0, 2], sizes = [4, 16, 16], strides = [1, 1, 1]} : vector<4x18x18xf32> to vector<4x16x16xf32>
    %9 = vector.extract_strided_slice %5 {offsets = [0, 1, 0], sizes = [4, 16, 16], strides = [1, 1, 1]} : vector<4x18x18xf32> to vector<4x16x16xf32>
    %10 = vector.extract_strided_slice %5 {offsets = [0, 1, 1], sizes = [4, 16, 16], strides = [1, 1, 1]} : vector<4x18x18xf32> to vector<4x16x16xf32>
    %11 = vector.extract_strided_slice %5 {offsets = [0, 1, 2], sizes = [4, 16, 16], strides = [1, 1, 1]} : vector<4x18x18xf32> to vector<4x16x16xf32>
    %12 = vector.extract_strided_slice %5 {offsets = [0, 2, 0], sizes = [4, 16, 16], strides = [1, 1, 1]} : vector<4x18x18xf32> to vector<4x16x16xf32>
    %13 = vector.extract_strided_slice %5 {offsets = [0, 2, 1], sizes = [4, 16, 16], strides = [1, 1, 1]} : vector<4x18x18xf32> to vector<4x16x16xf32>
    %14 = vector.extract_strided_slice %5 {offsets = [0, 2, 2], sizes = [4, 16, 16], strides = [1, 1, 1]} : vector<4x18x18xf32> to vector<4x16x16xf32>
    %15 = tpu.concatenate %6, %7, %8, %9, %10, %11, %12, %13, %14 in 0 : vector<4x16x16xf32>, vector<4x16x16xf32>, vector<4x16x16xf32>, vector<4x16x16xf32>, vector<4x16x16xf32>, vector<4x16x16xf32>, vector<4x16x16xf32>, vector<4x16x16xf32>, vector<4x16x16xf32> -> vector<36x16x16xf32>
    %16 = vector.shape_cast %15 : vector<36x16x16xf32> to vector<36x256xf32>
    %c0_4 = arith.constant 0 : index
    %c0_5 = arith.constant 0 : index
    %17 = vector.load %arg2[%c0_4, %c0_5] : memref<8x36xf32, #tpu.memory_space<vmem>>, vector<8x36xf32>
    %cst_6 = arith.constant dense<0.000000e+00> : vector<8x256xf32>
    %18 = tpu.matmul %17, %16, %cst_6 {dimension_numbers = #tpu.dot_dimension_numbers<[1], [0], [0], [1], [0, 0, 1, 1], [], []>} : vector<8x36xf32>, vector<36x256xf32>, vector<8x256xf32> -> vector<8x256xf32>
    %c0_7 = arith.constant 0 : index
    %c0_8 = arith.constant 0 : index
    %19 = vector.load %arg3[%c0_7, %c0_8] : memref<8x1xf32, #tpu.memory_space<vmem>>, vector<8x1xf32>
    %20 = vector.broadcast %19 : vector<8x1xf32> to vector<8x256xf32>
    %21 = arith.mulf %18, %20 : vector<8x256xf32>
    %c0_9 = arith.constant 0 : index
    %c0_10 = arith.constant 0 : index
    %22 = vector.load %arg4[%c0_9, %c0_10] : memref<8x1xf32, #tpu.memory_space<vmem>>, vector<8x1xf32>
    %23 = vector.broadcast %22 : vector<8x1xf32> to vector<8x256xf32>
    %24 = arith.addf %21, %23 : vector<8x256xf32>
    %cst_11 = arith.constant 0.000000e+00 : f32
    %25 = vector.broadcast %cst_11 : f32 to vector<8x256xf32>
    %26 = arith.maximumf %24, %25 : vector<8x256xf32>
    %c0_12 = arith.constant 0 : index
    %c0_13 = arith.constant 0 : index
    %c0_14 = arith.constant 0 : index
    %27 = vector.load %arg5[%c0_12, %c0_13, %c0_14] : memref<1x8x256xf32, #tpu.memory_space<vmem>>, vector<1x8x256xf32>
    %28 = vector.shape_cast %27 : vector<1x8x256xf32> to vector<8x256xf32>
    %29 = vector.shape_cast %26 : vector<8x256xf32> to vector<1x8x256xf32>
    tpu.vector_store %arg5[%c0_12, %c0_13, %c0_14], %29 {strides = array<i32>} : memref<1x8x256xf32, #tpu.memory_space<vmem>>, vector<1x8x256xf32>,
    return
  }
  func.func @transform_0(%arg0: i32) -> (i32, i32, i32, i32) {
    %c0_i32 = arith.constant 0 : i32
    %c0_i32_0 = arith.constant 0 : i32
    %c0_i32_1 = arith.constant 0 : i32
    %c0_i32_2 = arith.constant 0 : i32
    return %arg0, %c0_i32, %c0_i32_0, %c0_i32_1 : i32, i32, i32, i32
  }
  func.func @transform_1(%arg0: i32) -> (i32, i32) {
    %c0_i32 = arith.constant 0 : i32
    %c0_i32_0 = arith.constant 0 : i32
    %c0_i32_1 = arith.constant 0 : i32
    return %c0_i32, %c0_i32_0 : i32, i32
  }
  func.func @transform_2(%arg0: i32) -> (i32, i32) {
    %c0_i32 = arith.constant 0 : i32
    %c0_i32_0 = arith.constant 0 : i32
    %c0_i32_1 = arith.constant 0 : i32
    return %c0_i32, %c0_i32_0 : i32, i32
  }
  func.func @transform_3(%arg0: i32) -> (i32, i32) {
    %c0_i32 = arith.constant 0 : i32
    %c0_i32_0 = arith.constant 0 : i32
    %c0_i32_1 = arith.constant 0 : i32
    return %c0_i32, %c0_i32_0 : i32, i32
  }
  func.func @transform_4(%arg0: i32) -> (i32, i32, i32) {
    %c0_i32 = arith.constant 0 : i32
    %c0_i32_0 = arith.constant 0 : i32
    %c0_i32_1 = arith.constant 0 : i32
    return %arg0, %c0_i32, %c0_i32_0 : i32, i32, i32
  }
}

</mosaic_0001>

<llo_original>
// kernel: tpu_custom_call.1
$region0: #{tpu_custom_call.1}
  #allocation0 [shape = 'u32[]', space=smem, size = 0x4, offset = 0x4, fixed_abs, tag = 'smem constant byte address 0x4 - core index']
  #allocation1 [shape = 'u32[144,128]{1,0:T(1,128)}', space=vmem, size = 0x12000, scoped, tag = 'internal scratch']
  %s0 = inlined_call_operand.hbm [shape: f32[2,4,16,16], index: 0, kind: input, shape index: {}]
  %s1 = inlined_call_operand.vmem [shape: f32[8,36], index: 1, kind: input, shape index: {}]
  %s2 = inlined_call_operand.vmem [shape: f32[8,1], index: 2, kind: input, shape index: {}]
  %s3 = inlined_call_operand.vmem [shape: f32[8,1], index: 3, kind: input, shape index: {}]
  %s4 = inlined_call_operand.hbm [shape: f32[2,8,256], index: 4, kind: output, shape index: {}]
  %s5 = sld [smem:[#allocation0]]
  $region53: #{tpu_custom_call.1} parent=0
    _
  %s7 = ssub.s32 1, %s5
  %s8 = scalar_select 0, %s7, %s5
  $region1: #{tpu_custom_call.1} parent=0
    #allocation2 [shape = 'u8[65536]{0}', space=vmem, size = 0x10000, scoped, tag = 'input window, operand 0']
    #allocation3 [shape = 's32[2]{0}', space=sflag, size = 0x8, scoped, tag = 'scoped memory for tpu_custom_call.1']
    #allocation4 [shape = 's32[2]{0}', space=sflag, size = 0x8, scoped, tag = 'scoped memory for tpu_custom_call.1']
    #allocation5 [shape = 'u8[16384]{0}', space=vmem, size = 0x4000, scoped, tag = 'output window, operand 0']
    %9 = vsyncpa [#allocation3], 0
    %s10 = scalar_lea.sflag [#allocation3], 1
    %11 = vsyncpa %s10, 0
    %12 = vsyncpa [#allocation4], 0
    %s13 = scalar_lea.sflag [#allocation4], 1
    %14 = vsyncpa %s13, 0
    loop: start=0, step=1, limit=4
    $region2: #{tpu_custom_call.1} parent=1 // loop_pre_header
      _
    $region3: #{tpu_custom_call.1} parent=1 // loop_header
      %s16 = sphi 0, %s20
      %p17 = scmp.ge.s32.totalorder %s16, 4
      %s26 = sphi 0, %s28
      %s29 = sphi 0, %s26
      %s30 = sphi 0, %s29
      %s46 = sphi 0, %s30
      %s50 = sphi 0, %s50
      %s52 = sphi 0, %s50
      %s53 = sphi 0, %s52
      %s67 = sphi 0, %s53
      %s71 = sphi 0, %s71
      %s73 = sphi 0, %s71
      %s74 = sphi 0, %s73
      %s88 = sphi 0, %s74
      %s92 = sphi 0, %s92
      %s94 = sphi 0, %s92
      %s95 = sphi 0, %s94
      %s109 = sphi 0, %s95
      %s115 = sphi 0, %s117
      %s118 = sphi 0, %s115
      %s119 = sphi 0, %s118
      %s135 = sphi 0, %s119
    $region4: #{tpu_custom_call.1} parent=1 // loop_header_branch
      %19 = sbr.rel (%p17) target = $region8
    $region5: #{tpu_custom_call.1} parent=1 // loop_body
      %s21 = ssub.s32 %s16, 1
      %s22 = ssub.s32 %s16, 2
      %s23 = sadd.s32 %s16, 1
      %s24 = ssub.s32 %s16, %s23
      %p25 = scmp.eq.s32.totalorder %s24, 0
      %s27 = sadd.s32 %s26, 1
      %s28 = scalar_select %p25, %s26, %s27
      %p31 = pneg %p25
      %p32 = scmp.eq.s32.totalorder %s16, 1
      %p33 = por %p31, %p32
      %p34 = scmp.ne.s32.totalorder %s26, %s29
      %p35 = scmp.eq.s32.totalorder %s16, 0
      %p36 = por %p34, %p35
      %p37 = scmp.ne.s32.totalorder %s26, %s29
      %p38 = scmp.eq.s32.totalorder %s21, 1
      %p39 = por %p37, %p38
      %p40 = scmp.ne.s32.totalorder %s29, %s30
      %p41 = scmp.eq.s32.totalorder %s21, 0
      %p42 = por %p40, %p41
      %p43 = scmp.ne.s32.totalorder %s29, %s30
      %p44 = scmp.eq.s32.totalorder %s22, 1
      %p45 = por %p43, %p44
      %p47 = scmp.ne.s32.totalorder %s30, %s46
      %p48 = scmp.eq.s32.totalorder %s22, 0
      %p49 = por %p47, %p48
      %s51 = sadd.s32 %s50, 1
      %p54 = scmp.eq.s32.totalorder %s16, 1
      %p55 = scmp.ne.s32.totalorder %s50, %s52
      %p56 = scmp.eq.s32.totalorder %s16, 0
      %p57 = por %p55, %p56
      %p58 = scmp.ne.s32.totalorder %s50, %s52
      %p59 = scmp.eq.s32.totalorder %s21, 1
      %p60 = por %p58, %p59
      %p61 = scmp.ne.s32.totalorder %s52, %s53
      %p62 = scmp.eq.s32.totalorder %s21, 0
      %p63 = por %p61, %p62
      %p64 = scmp.ne.s32.totalorder %s52, %s53
      %p65 = scmp.eq.s32.totalorder %s22, 1
      %p66 = por %p64, %p65
      %p68 = scmp.ne.s32.totalorder %s53, %s67
      %p69 = scmp.eq.s32.totalorder %s22, 0
      %p70 = por %p68, %p69
      %s72 = sadd.s32 %s71, 1
      %p75 = scmp.eq.s32.totalorder %s16, 1
      %p76 = scmp.ne.s32.totalorder %s71, %s73
      %p77 = scmp.eq.s32.totalorder %s16, 0
      %p78 = por %p76, %p77
      %p79 = scmp.ne.s32.totalorder %s71, %s73
      %p80 = scmp.eq.s32.totalorder %s21, 1
      %p81 = por %p79, %p80
      %p82 = scmp.ne.s32.totalorder %s73, %s74
      %p83 = scmp.eq.s32.totalorder %s21, 0
      %p84 = por %p82, %p83
      %p85 = scmp.ne.s32.totalorder %s73, %s74
      %p86 = scmp.eq.s32.totalorder %s22, 1
      %p87 = por %p85, %p86
      %p89 = scmp.ne.s32.totalorder %s74, %s88
      %p90 = scmp.eq.s32.totalorder %s22, 0
      %p91 = por %p89, %p90
      %s93 = sadd.s32 %s92, 1
      %p96 = scmp.eq.s32.totalorder %s16, 1
      %p97 = scmp.ne.s32.totalorder %s92, %s94
      %p98 = scmp.eq.s32.totalorder %s16, 0
      %p99 = por %p97, %p98
      %p100 = scmp.ne.s32.totalorder %s92, %s94
      %p101 = scmp.eq.s32.totalorder %s21, 1
      %p102 = por %p100, %p101
      %p103 = scmp.ne.s32.totalorder %s94, %s95
      %p104 = scmp.eq.s32.totalorder %s21, 0
      %p105 = por %p103, %p104
      %p106 = scmp.ne.s32.totalorder %s94, %s95
      %p107 = scmp.eq.s32.totalorder %s22, 1
      %p108 = por %p106, %p107
      %p110 = scmp.ne.s32.totalorder %s95, %s109
      %p111 = scmp.eq.s32.totalorder %s22, 0
      %p112 = por %p110, %p111
      %s113 = ssub.s32 %s16, %s23
      %p114 = scmp.eq.s32.totalorder %s113, 0
      %s116 = sadd.s32 %s115, 1
      %s117 = scalar_select %p114, %s115, %s116
      %p120 = pneg %p114
      %p121 = scmp.eq.s32.totalorder %s16, 1
      %p122 = por %p120, %p121
      %p123 = scmp.ne.s32.totalorder %s115, %s118
      %p124 = scmp.eq.s32.totalorder %s16, 0
      %p125 = por %p123, %p124
      %p126 = scmp.ne.s32.totalorder %s115, %s118
      %p127 = scmp.eq.s32.totalorder %s21, 1
      %p128 = por %p126, %p127
      %p129 = scmp.ne.s32.totalorder %s118, %s119
      %p130 = scmp.eq.s32.totalorder %s21, 0
      %p131 = por %p129, %p130
      %p132 = scmp.ne.s32.totalorder %s118, %s119
      %p133 = scmp.eq.s32.totalorder %s22, 1
      %p134 = por %p132, %p133
      %p136 = scmp.ne.s32.totalorder %s119, %s135
      %p137 = scmp.eq.s32.totalorder %s22, 0
      %p138 = por %p136, %p137
      %p139 = scmp.le.s32.totalorder 1, %s16
      %p140 = scmp.lt.s32.totalorder %s16, 3
      %p141 = pnand %p139, %p140
      %p142 = pneg %p141
      // Predicated region
      $region9: #{tpu_custom_call.1} parent=5 // pred_check
        _
      $region10: #{tpu_custom_call.1} parent=5 // pred_check_branch
        %144 = sbr.rel (%p141) target = $region12
      $region11: #{tpu_custom_call.1} parent=5 // pred_region
        %s145 = ssub.s32 %s16, 1
        // Predicated region
        $region13: #{tpu_custom_call.1} parent=11 // pred_check
          %p146 = pneg %p63
        $region14: #{tpu_custom_call.1} parent=11 // pred_check_branch
          %148 = sbr.rel (%p146) target = $region16
        $region15: #{tpu_custom_call.1} parent=11 // pred_region
          _
        $region16: #{tpu_custom_call.1} parent=11 // pred_fallthru
          _
        // Predicated region
        $region17: #{tpu_custom_call.1} parent=11 // pred_check
          %p149 = pneg %p84
        $region18: #{tpu_custom_call.1} parent=11 // pred_check_branch
          %151 = sbr.rel (%p149) target = $region20
        $region19: #{tpu_custom_call.1} parent=11 // pred_region
          _
        $region20: #{tpu_custom_call.1} parent=11 // pred_fallthru
          _
        // Predicated region
        $region21: #{tpu_custom_call.1} parent=11 // pred_check
          %p152 = pneg %p105
        $region22: #{tpu_custom_call.1} parent=11 // pred_check_branch
          %154 = sbr.rel (%p152) target = $region24
        $region23: #{tpu_custom_call.1} parent=11 // pred_region
          _
        $region24: #{tpu_custom_call.1} parent=11 // pred_fallthru
          _
      $region12: #{tpu_custom_call.1} parent=5 // pred_fallthru
        _
      %p155 = scmp.lt.s32.totalorder %s16, 2
      // Predicated region
      $region25: #{tpu_custom_call.1} parent=5 // pred_check
        %p156 = pneg %p155
      $region26: #{tpu_custom_call.1} parent=5 // pred_check_branch
        %158 = sbr.rel (%p156) target = $region28
      $region27: #{tpu_custom_call.1} parent=5 // pred_region
        // Predicated region
        $region29: #{tpu_custom_call.1} parent=27 // pred_check
          %p159 = pneg %p36
        $region30: #{tpu_custom_call.1} parent=27 // pred_check_branch
          %161 = sbr.rel (%p159) target = $region32
        $region31: #{tpu_custom_call.1} parent=27 // pred_region
          %s162 = sand.u32 %s26, 1
          %s163 = scalar_lea.sflag [#allocation3], %s162
          %s164 = sand.u32 %s26, 1
          %s165 = smul.addr %s164, 64
          %s166 = scalar_lea.vmem [#allocation2], %s165
          %s168 = ssub.s32 1024, 1024
          %169 = vsyncadd %s163, %s168
          %s170 = smul.addr %s16, 8
          %s171 = smul.addr %s170, 128
          %s172 = scalar_lea.hbm %s0, %s171
          %s173 = sshll.u32 %s166, 4
          %s174 = int_to_ptr.vmem [resolvable:$true] %s173
          %179 = dma.hbm_to_vmem [thread:$0]  %s172, 1024, %s174, %s163, 128, 128, 8
        $region32: #{tpu_custom_call.1} parent=27 // pred_fallthru
          _
      $region28: #{tpu_custom_call.1} parent=5 // pred_fallthru
        _
      %p180 = scmp.le.s32.totalorder 1, %s16
      %p181 = scmp.lt.s32.totalorder %s16, 3
      %p182 = pnand %p180, %p181
      %p183 = pneg %p182
      // Predicated region
      $region33: #{tpu_custom_call.1} parent=5 // pred_check
        _
      $region34: #{tpu_custom_call.1} parent=5 // pred_check_branch
        %185 = sbr.rel (%p182) target = $region36
      $region35: #{tpu_custom_call.1} parent=5 // pred_region
        %s186 = ssub.s32 %s16, 1
        %s187 = sand.u32 %s29, 1
        %s188 = scalar_lea.sflag [#allocation3], %s187
        %s189 = sand.u32 %s29, 1
        %s190 = smul.addr %s189, 64
        %s191 = scalar_lea.vmem [#allocation2], %s190
        // Predicated region
        $region37: #{tpu_custom_call.1} parent=35 // pred_check
          %p192 = pneg %p42
        $region38: #{tpu_custom_call.1} parent=35 // pred_check_branch
          %194 = sbr.rel (%p192) target = $region40
        $region39: #{tpu_custom_call.1} parent=35 // pred_region
          %195 = dma.done %s188, 1024
        $region40: #{tpu_custom_call.1} parent=35 // pred_fallthru
          _
        %s196 = sand.u32 %s29, 1
        %s197 = scalar_lea.sflag [#allocation3], %s196
        %s198 = sand.u32 %s29, 1
        %s199 = smul.addr %s198, 64
        %s200 = scalar_lea.vmem [#allocation2], %s199
        %p201 = pneg %p42
        %p202 = pneg %p39
        %p203 = pneg %p63
        %p204 = pneg %p60
        %p205 = pneg %p84
        %p206 = pneg %p81
        %p207 = pneg %p105
        %p208 = pneg %p102
        %p209 = pneg %p131
        %p210 = pneg %p128
        %s211 = sand.u32 %s118, 1
        %s212 = scalar_lea.sflag [#allocation4], %s211
        %s213 = sand.u32 %s118, 1
        %s214 = smul.addr %s213, 16
        %s215 = scalar_lea.vmem [#allocation5], %s214
        %v216 = vld [vmem:[%s191] sm:$0xff]
        %v217 = vld [vmem:[%s191 + $0x8] sm:$0xff]
        %v218 = vld [vmem:[%s191 + $0x10] sm:$0xff]
        %v219 = vld [vmem:[%s191 + $0x18] sm:$0xff]
        %v220 = vld [vmem:[%s191 + $0x20] sm:$0xff]
        %v221 = vld [vmem:[%s191 + $0x28] sm:$0xff]
        %v222 = vld [vmem:[%s191 + $0x30] sm:$0xff]
        %v223 = vld [vmem:[%s191 + $0x38] sm:$0xff]
        %vm232 = vcmask 1040384
        %v233 = vrot.slane %v216, 7
        %v234 = vrot.slane %v217, 7
        %v235 = vsel %vm232, %v233, %v234
        %v236 = vrot.slane %v218, 7
        %v237 = vrot.slane %v219, 7
        %v238 = vsel %vm232, %v236, %v237
        %v239 = vrot.slane %v220, 7
        %v240 = vrot.slane %v221, 7
        %v241 = vsel %vm232, %v239, %v240
        %v242 = vrot.slane %v222, 7
        %v243 = vrot.slane %v223, 7
        %v244 = vsel %vm232, %v242, %v243
        %v253 = vsel %vm232, 0.0, %v233
        %v254 = vsel %vm232, 0.0, %v236
        %v255 = vsel %vm232, 0.0, %v239
        %v256 = vsel %vm232, 0.0, %v242
        %v257 = vsel %vm232, %v234, 0.0
        %v258 = vsel %vm232, %v237, 0.0
        %v259 = vsel %vm232, %v240, 0.0
        %v260 = vsel %vm232, %v243, 0.0
        %269 = vrot.lane.b32.xlu0 %v253, 1
        %v270 = vpop.permute.xlu0 %269
        %271 = vrot.lane.b32.xlu0 %v235, 1
        %v272 = vpop.permute.xlu0 %271
        %273 = vrot.lane.b32.xlu0 %v257, 1
        %v274 = vpop.permute.xlu0 %273
        %275 = vrot.lane.b32.xlu0 %v254, 1
        %v276 = vpop.permute.xlu0 %275
        %277 = vrot.lane.b32.xlu0 %v238, 1
        %v278 = vpop.permute.xlu0 %277
        %279 = vrot.lane.b32.xlu0 %v258, 1
        %v280 = vpop.permute.xlu0 %279
        %281 = vrot.lane.b32.xlu0 %v255, 1
        %v282 = vpop.permute.xlu0 %281
        %283 = vrot.lane.b32.xlu0 %v241, 1
        %v284 = vpop.permute.xlu0 %283
        %285 = vrot.lane.b32.xlu0 %v259, 1
        %v286 = vpop.permute.xlu0 %285
        %287 = vrot.lane.b32.xlu0 %v256, 1
        %v288 = vpop.permute.xlu0 %287
        %289 = vrot.lane.b32.xlu0 %v244, 1
        %v290 = vpop.permute.xlu0 %289
        %291 = vrot.lane.b32.xlu0 %v260, 1
        %v292 = vpop.permute.xlu0 %291
        %vm305 = vcmask 7168
        %v306 = vsel %vm305, 0.0, %v270
        %v307 = vsel %vm305, 0.0, %v272
        %v308 = vsel %vm305, 0.0, %v274
        %v309 = vsel %vm305, 0.0, %v276
        %v310 = vsel %vm305, 0.0, %v278
        %v311 = vsel %vm305, 0.0, %v280
        %v312 = vsel %vm305, 0.0, %v282
        %v313 = vsel %vm305, 0.0, %v284
        %v314 = vsel %vm305, 0.0, %v286
        %v315 = vsel %vm305, 0.0, %v288
        %v316 = vsel %vm305, 0.0, %v290
        %v317 = vsel %vm305, 0.0, %v292
        %vm318 = vcmask 138240
        %v319 = vsel %vm318, %v306, 0.0
        %v320 = vsel %vm318, %v307, 0.0
        %v321 = vsel %vm318, %v308, 0.0
        %v322 = vsel %vm318, %v309, 0.0
        %v323 = vsel %vm318, %v310, 0.0
        %v324 = vsel %vm318, %v311, 0.0
        %v325 = vsel %vm318, %v312, 0.0
        %v326 = vsel %vm318, %v313, 0.0
        %v327 = vsel %vm318, %v314, 0.0
        %v328 = vsel %vm318, %v315, 0.0
        %v329 = vsel %vm318, %v316, 0.0
        %v330 = vsel %vm318, %v317, 0.0
        %339 = vrot.lane.b32.xlu0 %v319, 127
        %v340 = vpop.permute.xlu0 %339
        %341 = vrot.lane.b32.xlu0 %v320, 127
        %v342 = vpop.permute.xlu0 %341
        %343 = vrot.lane.b32.xlu0 %v322, 127
        %v344 = vpop.permute.xlu0 %343
        %345 = vrot.lane.b32.xlu0 %v323, 127
        %v346 = vpop.permute.xlu0 %345
        %347 = vrot.lane.b32.xlu0 %v325, 127
        %v348 = vpop.permute.xlu0 %347
        %349 = vrot.lane.b32.xlu0 %v326, 127
        %v350 = vpop.permute.xlu0 %349
        %351 = vrot.lane.b32.xlu0 %v328, 127
        %v352 = vpop.permute.xlu0 %351
        %353 = vrot.lane.b32.xlu0 %v329, 127
        %v354 = vpop.permute.xlu0 %353
        %363 = vrot.lane.b32.xlu0 %v319, 126
        %v364 = vpop.permute.xlu0 %363
        %365 = vrot.lane.b32.xlu0 %v320, 126
        %v366 = vpop.permute.xlu0 %365
        %367 = vrot.lane.b32.xlu0 %v322, 126
        %v368 = vpop.permute.xlu0 %367
        %369 = vrot.lane.b32.xlu0 %v323, 126
        %v370 = vpop.permute.xlu0 %369
        %371 = vrot.lane.b32.xlu0 %v325, 126
        %v372 = vpop.permute.xlu0 %371
        %373 = vrot.lane.b32.xlu0 %v326, 126
        %v374 = vpop.permute.xlu0 %373
        %375 = vrot.lane.b32.xlu0 %v328, 126
        %v376 = vpop.permute.xlu0 %375
        %377 = vrot.lane.b32.xlu0 %v329, 126
        %v378 = vpop.permute.xlu0 %377
        %vm391 = vcmask 1046528
        %v392 = vrot.slane %v319, 1
        %v393 = vrot.slane %v320, 1
        %v394 = vsel %vm391, %v392, %v393
        %v395 = vrot.slane %v321, 1
        %v396 = vsel %vm391, %v393, %v395
        %v397 = vrot.slane %v322, 1
        %v398 = vrot.slane %v323, 1
        %v399 = vsel %vm391, %v397, %v398
        %v400 = vrot.slane %v324, 1
        %v401 = vsel %vm391, %v398, %v400
        %v402 = vrot.slane %v325, 1
        %v403 = vrot.slane %v326, 1
        %v404 = vsel %vm391, %v402, %v403
        %v405 = vrot.slane %v327, 1
        %v406 = vsel %vm391, %v403, %v405
        %v407 = vrot.slane %v328, 1
        %v408 = vrot.slane %v329, 1
        %v409 = vsel %vm391, %v407, %v408
        %v410 = vrot.slane %v330, 1
        %v411 = vsel %vm391, %v408, %v410
        %420 = vrot.lane.b32.xlu0 %v394, 127
        %v421 = vpop.permute.xlu0 %420
        %422 = vrot.lane.b32.xlu0 %v396, 127
        %v423 = vpop.permute.xlu0 %422
        %424 = vrot.lane.b32.xlu0 %v399, 127
        %v425 = vpop.permute.xlu0 %424
        %426 = vrot.lane.b32.xlu0 %v401, 127
        %v427 = vpop.permute.xlu0 %426
        %428 = vrot.lane.b32.xlu0 %v404, 127
        %v429 = vpop.permute.xlu0 %428
        %430 = vrot.lane.b32.xlu0 %v406, 127
        %v431 = vpop.permute.xlu0 %430
        %432 = vrot.lane.b32.xlu0 %v409, 127
        %v433 = vpop.permute.xlu0 %432
        %434 = vrot.lane.b32.xlu0 %v411, 127
        %v435 = vpop.permute.xlu0 %434
        %444 = vrot.lane.b32.xlu0 %v394, 126
        %v445 = vpop.permute.xlu0 %444
        %446 = vrot.lane.b32.xlu0 %v396, 126
        %v447 = vpop.permute.xlu0 %446
        %448 = vrot.lane.b32.xlu0 %v399, 126
        %v449 = vpop.permute.xlu0 %448
        %450 = vrot.lane.b32.xlu0 %v401, 126
        %v451 = vpop.permute.xlu0 %450
        %452 = vrot.lane.b32.xlu0 %v404, 126
        %v453 = vpop.permute.xlu0 %452
        %454 = vrot.lane.b32.xlu0 %v406, 126
        %v455 = vpop.permute.xlu0 %454
        %456 = vrot.lane.b32.xlu0 %v409, 126
        %v457 = vpop.permute.xlu0 %456
        %458 = vrot.lane.b32.xlu0 %v411, 126
        %v459 = vpop.permute.xlu0 %458
        %vm468 = vcmask 1045504
        %v469 = vrot.slane %v319, 2
        %v470 = vrot.slane %v320, 2
        %v471 = vsel %vm468, %v469, %v470
        %v472 = vrot.slane %v321, 2
        %v473 = vsel %vm468, %v470, %v472
        %v474 = vrot.slane %v322, 2
        %v475 = vrot.slane %v323, 2
        %v476 = vsel %vm468, %v474, %v475
        %v477 = vrot.slane %v324, 2
        %v478 = vsel %vm468, %v475, %v477
        %v479 = vrot.slane %v325, 2
        %v480 = vrot.slane %v326, 2
        %v481 = vsel %vm468, %v479, %v480
        %v482 = vrot.slane %v327, 2
        %v483 = vsel %vm468, %v480, %v482
        %v484 = vrot.slane %v328, 2
        %v485 = vrot.slane %v329, 2
        %v486 = vsel %vm468, %v484, %v485
        %v487 = vrot.slane %v330, 2
        %v488 = vsel %vm468, %v485, %v487
        %497 = vrot.lane.b32.xlu0 %v471, 127
        %v498 = vpop.permute.xlu0 %497
        %499 = vrot.lane.b32.xlu0 %v473, 127
        %v500 = vpop.permute.xlu0 %499
        %501 = vrot.lane.b32.xlu0 %v476, 127
        %v502 = vpop.permute.xlu0 %501
        %503 = vrot.lane.b32.xlu0 %v478, 127
        %v504 = vpop.permute.xlu0 %503
        %505 = vrot.lane.b32.xlu0 %v481, 127
        %v506 = vpop.permute.xlu0 %505
        %507 = vrot.lane.b32.xlu0 %v483, 127
        %v508 = vpop.permute.xlu0 %507
        %509 = vrot.lane.b32.xlu0 %v486, 127
        %v510 = vpop.permute.xlu0 %509
        %511 = vrot.lane.b32.xlu0 %v488, 127
        %v512 = vpop.permute.xlu0 %511
        %521 = vrot.lane.b32.xlu0 %v471, 126
        %v522 = vpop.permute.xlu0 %521
        %523 = vrot.lane.b32.xlu0 %v473, 126
        %v524 = vpop.permute.xlu0 %523
        %525 = vrot.lane.b32.xlu0 %v476, 126
        %v526 = vpop.permute.xlu0 %525
        %527 = vrot.lane.b32.xlu0 %v478, 126
        %v528 = vpop.permute.xlu0 %527
        %529 = vrot.lane.b32.xlu0 %v481, 126
        %v530 = vpop.permute.xlu0 %529
        %531 = vrot.lane.b32.xlu0 %v483, 126
        %v532 = vpop.permute.xlu0 %531
        %533 = vrot.lane.b32.xlu0 %v486, 126
        %v534 = vpop.permute.xlu0 %533
        %535 = vrot.lane.b32.xlu0 %v488, 126
        %v536 = vpop.permute.xlu0 %535
        %v545 = vcombine.low %v319, %v325
        %v546 = vcombine.high %v319, %v325
        %v548 = vunpack.c.l.s4 1983009808
        %v549 = vunpack.c.0.s8 %v548
        %v550 = vlaneseq
        %v551 = vshrl.u32 %v550, 7
        %v552 = vsub.s32 %v549, %v551
        %v553 = vrot.slane %v545, %v552
        %v555 = vunpack.c.l.s4 1983009808
        %v556 = vunpack.c.0.s8 %v555
        %v557 = vlaneseq
        %v558 = vshrl.u32 %v557, 7
        %v559 = vsub.s32 %v556, %v558
        %v560 = vrot.slane %v546, %v559
        %v561 = vcombine.low %v322, %v328
        %v562 = vcombine.high %v322, %v328
        %v564 = vunpack.c.l.s4 1983009808
        %v565 = vunpack.c.0.s8 %v564
        %v566 = vlaneseq
        %v567 = vshrl.u32 %v566, 7
        %v568 = vsub.s32 %v565, %v567
        %v569 = vrot.slane %v561, %v568
        %v571 = vunpack.c.l.s4 1983009808
        %v572 = vunpack.c.0.s8 %v571
        %v573 = vlaneseq
        %v574 = vshrl.u32 %v573, 7
        %v575 = vsub.s32 %v572, %v574
        %v576 = vrot.slane %v562, %v575
        %v577 = vcombine.low %v340, %v348
        %v578 = vcombine.high %v340, %v348
        %v580 = vunpack.c.l.s4 1983009808
        %v581 = vunpack.c.0.s8 %v580
        %v582 = vlaneseq
        %v583 = vshrl.u32 %v582, 7
        %v584 = vsub.s32 %v581, %v583
        %v585 = vrot.slane %v577, %v584
        %v587 = vunpack.c.l.s4 1983009808
        %v588 = vunpack.c.0.s8 %v587
        %v589 = vlaneseq
        %v590 = vshrl.u32 %v589, 7
        %v591 = vsub.s32 %v588, %v590
        %v592 = vrot.slane %v578, %v591
        %v593 = vcombine.low %v344, %v352
        %v594 = vcombine.high %v344, %v352
        %v596 = vunpack.c.l.s4 1983009808
        %v597 = vunpack.c.0.s8 %v596
        %v598 = vlaneseq
        %v599 = vshrl.u32 %v598, 7
        %v600 = vsub.s32 %v597, %v599
        %v601 = vrot.slane %v593, %v600
        %v603 = vunpack.c.l.s4 1983009808
        %v604 = vunpack.c.0.s8 %v603
        %v605 = vlaneseq
        %v606 = vshrl.u32 %v605, 7
        %v607 = vsub.s32 %v604, %v606
        %v608 = vrot.slane %v594, %v607
        %v609 = vcombine.low %v553, %v569
        %v610 = vcombine.high %v553, %v569
        %v612 = vunpack.c.l.s4 1934713408
        %v613 = vunpack.c.0.s8 %v612
        %v614 = vlaneseq
        %v615 = vshrl.u32 %v614, 7
        %v616 = vsub.s32 %v613, %v615
        %v617 = vrot.slane %v609, %v616
        %v619 = vunpack.c.l.s4 1934713408
        %v620 = vunpack.c.0.s8 %v619
        %v621 = vlaneseq
        %v622 = vshrl.u32 %v621, 7
        %v623 = vsub.s32 %v620, %v622
        %v624 = vrot.slane %v610, %v623
        %v625 = vcombine.low %v560, %v576
        %v626 = vcombine.high %v560, %v576
        %v628 = vunpack.c.l.s4 1934713408
        %v629 = vunpack.c.0.s8 %v628
        %v630 = vlaneseq
        %v631 = vshrl.u32 %v630, 7
        %v632 = vsub.s32 %v629, %v631
        %v633 = vrot.slane %v625, %v632
        %v635 = vunpack.c.l.s4 1934713408
        %v636 = vunpack.c.0.s8 %v635
        %v637 = vlaneseq
        %v638 = vshrl.u32 %v637, 7
        %v639 = vsub.s32 %v636, %v638
        %v640 = vrot.slane %v626, %v639
        %v641 = vcombine.low %v585, %v601
        %v642 = vcombine.high %v585, %v601
        %v644 = vunpack.c.l.s4 1934713408
        %v645 = vunpack.c.0.s8 %v644
        %v646 = vlaneseq
        %v647 = vshrl.u32 %v646, 7
        %v648 = vsub.s32 %v645, %v647
        %v649 = vrot.slane %v641, %v648
        %v651 = vunpack.c.l.s4 1934713408
        %v652 = vunpack.c.0.s8 %v651
        %v653 = vlaneseq
        %v654 = vshrl.u32 %v653, 7
        %v655 = vsub.s32 %v652, %v654
        %v656 = vrot.slane %v642, %v655
        %v657 = vcombine.low %v592, %v608
        %v658 = vcombine.high %v592, %v608
        %v660 = vunpack.c.l.s4 1934713408
        %v661 = vunpack.c.0.s8 %v660
        %v662 = vlaneseq
        %v663 = vshrl.u32 %v662, 7
        %v664 = vsub.s32 %v661, %v663
        %v665 = vrot.slane %v657, %v664
        %v667 = vunpack.c.l.s4 1934713408
        %v668 = vunpack.c.0.s8 %v667
        %v669 = vlaneseq
        %v670 = vshrl.u32 %v669, 7
        %v671 = vsub.s32 %v668, %v670
        %v672 = vrot.slane %v658, %v671
        %v673 = vcombine.low %v617, %v649
        %v674 = vcombine.high %v617, %v649
        %v675 = vcombine.low %v624, %v656
        %v676 = vcombine.high %v624, %v656
        %v677 = vcombine.low %v633, %v665
        %v678 = vcombine.high %v633, %v665
        %v679 = vcombine.low %v640, %v672
        %v680 = vcombine.high %v640, %v672
        %v681 = vcombine.low %v364, %v372
        %v682 = vcombine.high %v364, %v372
        %v684 = vunpack.c.l.s4 1983009808
        %v685 = vunpack.c.0.s8 %v684
        %v686 = vlaneseq
        %v687 = vshrl.u32 %v686, 7
        %v688 = vsub.s32 %v685, %v687
        %v689 = vrot.slane %v681, %v688
        %v691 = vunpack.c.l.s4 1983009808
        %v692 = vunpack.c.0.s8 %v691
        %v693 = vlaneseq
        %v694 = vshrl.u32 %v693, 7
        %v695 = vsub.s32 %v692, %v694
        %v696 = vrot.slane %v682, %v695
        %v697 = vcombine.low %v368, %v376
        %v698 = vcombine.high %v368, %v376
        %v700 = vunpack.c.l.s4 1983009808
        %v701 = vunpack.c.0.s8 %v700
        %v702 = vlaneseq
        %v703 = vshrl.u32 %v702, 7
        %v704 = vsub.s32 %v701, %v703
        %v705 = vrot.slane %v697, %v704
        %v707 = vunpack.c.l.s4 1983009808
        %v708 = vunpack.c.0.s8 %v707
        %v709 = vlaneseq
        %v710 = vshrl.u32 %v709, 7
        %v711 = vsub.s32 %v708, %v710
        %v712 = vrot.slane %v698, %v711
        %v713 = vcombine.low %v394, %v404
        %v714 = vcombine.high %v394, %v404
        %v716 = vunpack.c.l.s4 1983009808
        %v717 = vunpack.c.0.s8 %v716
        %v718 = vlaneseq
        %v719 = vshrl.u32 %v718, 7
        %v720 = vsub.s32 %v717, %v719
        %v721 = vrot.slane %v713, %v720
        %v723 = vunpack.c.l.s4 1983009808
        %v724 = vunpack.c.0.s8 %v723
        %v725 = vlaneseq
        %v726 = vshrl.u32 %v725, 7
        %v727 = vsub.s32 %v724, %v726
        %v728 = vrot.slane %v714, %v727
        %v729 = vcombine.low %v399, %v409
        %v730 = vcombine.high %v399, %v409
        %v732 = vunpack.c.l.s4 1983009808
        %v733 = vunpack.c.0.s8 %v732
        %v734 = vlaneseq
        %v735 = vshrl.u32 %v734, 7
        %v736 = vsub.s32 %v733, %v735
        %v737 = vrot.slane %v729, %v736
        %v739 = vunpack.c.l.s4 1983009808
        %v740 = vunpack.c.0.s8 %v739
        %v741 = vlaneseq
        %v742 = vshrl.u32 %v741, 7
        %v743 = vsub.s32 %v740, %v742
        %v744 = vrot.slane %v730, %v743
        %v745 = vcombine.low %v689, %v705
        %v746 = vcombine.high %v689, %v705
        %v748 = vunpack.c.l.s4 1934713408
        %v749 = vunpack.c.0.s8 %v748
        %v750 = vlaneseq
        %v751 = vshrl.u32 %v750, 7
        %v752 = vsub.s32 %v749, %v751
        %v753 = vrot.slane %v745, %v752
        %v755 = vunpack.c.l.s4 1934713408
        %v756 = vunpack.c.0.s8 %v755
        %v757 = vlaneseq
        %v758 = vshrl.u32 %v757, 7
        %v759 = vsub.s32 %v756, %v758
        %v760 = vrot.slane %v746, %v759
        %v761 = vcombine.low %v696, %v712
        %v762 = vcombine.high %v696, %v712
        %v764 = vunpack.c.l.s4 1934713408
        %v765 = vunpack.c.0.s8 %v764
        %v766 = vlaneseq
        %v767 = vshrl.u32 %v766, 7
        %v768 = vsub.s32 %v765, %v767
        %v769 = vrot.slane %v761, %v768
        %v771 = vunpack.c.l.s4 1934713408
        %v772 = vunpack.c.0.s8 %v771
        %v773 = vlaneseq
        %v774 = vshrl.u32 %v773, 7
        %v775 = vsub.s32 %v772, %v774
        %v776 = vrot.slane %v762, %v775
        %v777 = vcombine.low %v721, %v737
        %v778 = vcombine.high %v721, %v737
        %v780 = vunpack.c.l.s4 1934713408
        %v781 = vunpack.c.0.s8 %v780
        %v782 = vlaneseq
        %v783 = vshrl.u32 %v782, 7
        %v784 = vsub.s32 %v781, %v783
        %v785 = vrot.slane %v777, %v784
        %v787 = vunpack.c.l.s4 1934713408
        %v788 = vunpack.c.0.s8 %v787
        %v789 = vlaneseq
        %v790 = vshrl.u32 %v789, 7
        %v791 = vsub.s32 %v788, %v790
        %v792 = vrot.slane %v778, %v791
        %v793 = vcombine.low %v728, %v744
        %v794 = vcombine.high %v728, %v744
        %v796 = vunpack.c.l.s4 1934713408
        %v797 = vunpack.c.0.s8 %v796
        %v798 = vlaneseq
        %v799 = vshrl.u32 %v798, 7
        %v800 = vsub.s32 %v797, %v799
        %v801 = vrot.slane %v793, %v800
        %v803 = vunpack.c.l.s4 1934713408
        %v804 = vunpack.c.0.s8 %v803
        %v805 = vlaneseq
        %v806 = vshrl.u32 %v805, 7
        %v807 = vsub.s32 %v804, %v806
        %v808 = vrot.slane %v794, %v807
        %v809 = vcombine.low %v753, %v785
        %v810 = vcombine.high %v753, %v785
        %v811 = vcombine.low %v760, %v792
        %v812 = vcombine.high %v760, %v792
        %v813 = vcombine.low %v769, %v801
        %v814 = vcombine.high %v769, %v801
        %v815 = vcombine.low %v776, %v808
        %v816 = vcombine.high %v776, %v808
        %v817 = vcombine.low %v421, %v429
        %v818 = vcombine.high %v421, %v429
        %v820 = vunpack.c.l.s4 1983009808
        %v821 = vunpack.c.0.s8 %v820
        %v822 = vlaneseq
        %v823 = vshrl.u32 %v822, 7
        %v824 = vsub.s32 %v821, %v823
        %v825 = vrot.slane %v817, %v824
        %v827 = vunpack.c.l.s4 1983009808
        %v828 = vunpack.c.0.s8 %v827
        %v829 = vlaneseq
        %v830 = vshrl.u32 %v829, 7
        %v831 = vsub.s32 %v828, %v830
        %v832 = vrot.slane %v818, %v831
        %v833 = vcombine.low %v425, %v433
        %v834 = vcombine.high %v425, %v433
        %v836 = vunpack.c.l.s4 1983009808
        %v837 = vunpack.c.0.s8 %v836
        %v838 = vlaneseq
        %v839 = vshrl.u32 %v838, 7
        %v840 = vsub.s32 %v837, %v839
        %v841 = vrot.slane %v833, %v840
        %v843 = vunpack.c.l.s4 1983009808
        %v844 = vunpack.c.0.s8 %v843
        %v845 = vlaneseq
        %v846 = vshrl.u32 %v845, 7
        %v847 = vsub.s32 %v844, %v846
        %v848 = vrot.slane %v834, %v847
        %v849 = vcombine.low %v445, %v453
        %v850 = vcombine.high %v445, %v453
        %v852 = vunpack.c.l.s4 1983009808
        %v853 = vunpack.c.0.s8 %v852
        %v854 = vlaneseq
        %v855 = vshrl.u32 %v854, 7
        %v856 = vsub.s32 %v853, %v855
        %v857 = vrot.slane %v849, %v856
        %v859 = vunpack.c.l.s4 1983009808
        %v860 = vunpack.c.0.s8 %v859
        %v861 = vlaneseq
        %v862 = vshrl.u32 %v861, 7
        %v863 = vsub.s32 %v860, %v862
        %v864 = vrot.slane %v850, %v863
        %v865 = vcombine.low %v449, %v457
        %v866 = vcombine.high %v449, %v457
        %v868 = vunpack.c.l.s4 1983009808
        %v869 = vunpack.c.0.s8 %v868
        %v870 = vlaneseq
        %v871 = vshrl.u32 %v870, 7
        %v872 = vsub.s32 %v869, %v871
        %v873 = vrot.slane %v865, %v872
        %v875 = vunpack.c.l.s4 1983009808
        %v876 = vunpack.c.0.s8 %v875
        %v877 = vlaneseq
        %v878 = vshrl.u32 %v877, 7
        %v879 = vsub.s32 %v876, %v878
        %v880 = vrot.slane %v866, %v879
        %v881 = vcombine.low %v825, %v841
        %v882 = vcombine.high %v825, %v841
        %v884 = vunpack.c.l.s4 1934713408
        %v885 = vunpack.c.0.s8 %v884
        %v886 = vlaneseq
        %v887 = vshrl.u32 %v886, 7
        %v888 = vsub.s32 %v885, %v887
        %v889 = vrot.slane %v881, %v888
        %v891 = vunpack.c.l.s4 1934713408
        %v892 = vunpack.c.0.s8 %v891
        %v893 = vlaneseq
        %v894 = vshrl.u32 %v893, 7
        %v895 = vsub.s32 %v892, %v894
        %v896 = vrot.slane %v882, %v895
        %v897 = vcombine.low %v832, %v848
        %v898 = vcombine.high %v832, %v848
        %v900 = vunpack.c.l.s4 1934713408
        %v901 = vunpack.c.0.s8 %v900
        %v902 = vlaneseq
        %v903 = vshrl.u32 %v902, 7
        %v904 = vsub.s32 %v901, %v903
        %v905 = vrot.slane %v897, %v904
        %v907 = vunpack.c.l.s4 1934713408
        %v908 = vunpack.c.0.s8 %v907
        %v909 = vlaneseq
        %v910 = vshrl.u32 %v909, 7
        %v911 = vsub.s32 %v908, %v910
        %v912 = vrot.slane %v898, %v911
        %v913 = vcombine.low %v857, %v873
        %v914 = vcombine.high %v857, %v873
        %v916 = vunpack.c.l.s4 1934713408
        %v917 = vunpack.c.0.s8 %v916
        %v918 = vlaneseq
        %v919 = vshrl.u32 %v918, 7
        %v920 = vsub.s32 %v917, %v919
        %v921 = vrot.slane %v913, %v920
        %v923 = vunpack.c.l.s4 1934713408
        %v924 = vunpack.c.0.s8 %v923
        %v925 = vlaneseq
        %v926 = vshrl.u32 %v925, 7
        %v927 = vsub.s32 %v924, %v926
        %v928 = vrot.slane %v914, %v927
        %v929 = vcombine.low %v864, %v880
        %v930 = vcombine.high %v864, %v880
        %v932 = vunpack.c.l.s4 1934713408
        %v933 = vunpack.c.0.s8 %v932
        %v934 = vlaneseq
        %v935 = vshrl.u32 %v934, 7
        %v936 = vsub.s32 %v933, %v935
        %v937 = vrot.slane %v929, %v936
        %v939 = vunpack.c.l.s4 1934713408
        %v940 = vunpack.c.0.s8 %v939
        %v941 = vlaneseq
        %v942 = vshrl.u32 %v941, 7
        %v943 = vsub.s32 %v940, %v942
        %v944 = vrot.slane %v930, %v943
        %v945 = vcombine.low %v889, %v921
        %v946 = vcombine.high %v889, %v921
        %v947 = vcombine.low %v896, %v928
        %v948 = vcombine.high %v896, %v928
        %v949 = vcombine.low %v905, %v937
        %v950 = vcombine.high %v905, %v937
        %v951 = vcombine.low %v912, %v944
        %v952 = vcombine.high %v912, %v944
        %v953 = vcombine.low %v471, %v481
        %v954 = vcombine.high %v471, %v481
        %v956 = vunpack.c.l.s4 1983009808
        %v957 = vunpack.c.0.s8 %v956
        %v958 = vlaneseq
        %v959 = vshrl.u32 %v958, 7
        %v960 = vsub.s32 %v957, %v959
        %v961 = vrot.slane %v953, %v960
        %v963 = vunpack.c.l.s4 1983009808
        %v964 = vunpack.c.0.s8 %v963
        %v965 = vlaneseq
        %v966 = vshrl.u32 %v965, 7
        %v967 = vsub.s32 %v964, %v966
        %v968 = vrot.slane %v954, %v967
        %v969 = vcombine.low %v476, %v486
        %v970 = vcombine.high %v476, %v486
        %v972 = vunpack.c.l.s4 1983009808
        %v973 = vunpack.c.0.s8 %v972
        %v974 = vlaneseq
        %v975 = vshrl.u32 %v974, 7
        %v976 = vsub.s32 %v973, %v975
        %v977 = vrot.slane %v969, %v976
        %v979 = vunpack.c.l.s4 1983009808
        %v980 = vunpack.c.0.s8 %v979
        %v981 = vlaneseq
        %v982 = vshrl.u32 %v981, 7
        %v983 = vsub.s32 %v980, %v982
        %v984 = vrot.slane %v970, %v983
        %v985 = vcombine.low %v498, %v506
        %v986 = vcombine.high %v498, %v506
        %v988 = vunpack.c.l.s4 1983009808
        %v989 = vunpack.c.0.s8 %v988
        %v990 = vlaneseq
        %v991 = vshrl.u32 %v990, 7
        %v992 = vsub.s32 %v989, %v991
        %v993 = vrot.slane %v985, %v992
        %v995 = vunpack.c.l.s4 1983009808
        %v996 = vunpack.c.0.s8 %v995
        %v997 = vlaneseq
        %v998 = vshrl.u32 %v997, 7
        %v999 = vsub.s32 %v996, %v998
        %v1000 = vrot.slane %v986, %v999
        %v1001 = vcombine.low %v502, %v510
        %v1002 = vcombine.high %v502, %v510
        %v1004 = vunpack.c.l.s4 1983009808
        %v1005 = vunpack.c.0.s8 %v1004
        %v1006 = vlaneseq
        %v1007 = vshrl.u32 %v1006, 7
        %v1008 = vsub.s32 %v1005, %v1007
        %v1009 = vrot.slane %v1001, %v1008
        %v1011 = vunpack.c.l.s4 1983009808
        %v1012 = vunpack.c.0.s8 %v1011
        %v1013 = vlaneseq
        %v1014 = vshrl.u32 %v1013, 7
        %v1015 = vsub.s32 %v1012, %v1014
        %v1016 = vrot.slane %v1002, %v1015
        %v1017 = vcombine.low %v961, %v977
        %v1018 = vcombine.high %v961, %v977
        %v1020 = vunpack.c.l.s4 1934713408
        %v1021 = vunpack.c.0.s8 %v1020
        %v1022 = vlaneseq
        %v1023 = vshrl.u32 %v1022, 7
        %v1024 = vsub.s32 %v1021, %v1023
        %v1025 = vrot.slane %v1017, %v1024
        %v1027 = vunpack.c.l.s4 1934713408
        %v1028 = vunpack.c.0.s8 %v1027
        %v1029 = vlaneseq
        %v1030 = vshrl.u32 %v1029, 7
        %v1031 = vsub.s32 %v1028, %v1030
        %v1032 = vrot.slane %v1018, %v1031
        %v1033 = vcombine.low %v968, %v984
        %v1034 = vcombine.high %v968, %v984
        %v1036 = vunpack.c.l.s4 1934713408
        %v1037 = vunpack.c.0.s8 %v1036
        %v1038 = vlaneseq
        %v1039 = vshrl.u32 %v1038, 7
        %v1040 = vsub.s32 %v1037, %v1039
        %v1041 = vrot.slane %v1033, %v1040
        %v1043 = vunpack.c.l.s4 1934713408
        %v1044 = vunpack.c.0.s8 %v1043
        %v1045 = vlaneseq
        %v1046 = vshrl.u32 %v1045, 7
        %v1047 = vsub.s32 %v1044, %v1046
        %v1048 = vrot.slane %v1034, %v1047
        %v1049 = vcombine.low %v993, %v1009
        %v1050 = vcombine.high %v993, %v1009
        %v1052 = vunpack.c.l.s4 1934713408
        %v1053 = vunpack.c.0.s8 %v1052
        %v1054 = vlaneseq
        %v1055 = vshrl.u32 %v1054, 7
        %v1056 = vsub.s32 %v1053, %v1055
        %v1057 = vrot.slane %v1049, %v1056
        %v1059 = vunpack.c.l.s4 1934713408
        %v1060 = vunpack.c.0.s8 %v1059
        %v1061 = vlaneseq
        %v1062 = vshrl.u32 %v1061, 7
        %v1063 = vsub.s32 %v1060, %v1062
        %v1064 = vrot.slane %v1050, %v1063
        %v1065 = vcombine.low %v1000, %v1016
        %v1066 = vcombine.high %v1000, %v1016
        %v1068 = vunpack.c.l.s4 1934713408
        %v1069 = vunpack.c.0.s8 %v1068
        %v1070 = vlaneseq
        %v1071 = vshrl.u32 %v1070, 7
        %v1072 = vsub.s32 %v1069, %v1071
        %v1073 = vrot.slane %v1065, %v1072
        %v1075 = vunpack.c.l.s4 1934713408
        %v1076 = vunpack.c.0.s8 %v1075
        %v1077 = vlaneseq
        %v1078 = vshrl.u32 %v1077, 7
        %v1079 = vsub.s32 %v1076, %v1078
        %v1080 = vrot.slane %v1066, %v1079
        %v1081 = vcombine.low %v1025, %v1057
        %v1082 = vcombine.high %v1025, %v1057
        %v1083 = vcombine.low %v1032, %v1064
        %v1084 = vcombine.high %v1032, %v1064
        %v1085 = vcombine.low %v1041, %v1073
        %v1086 = vcombine.high %v1041, %v1073
        %v1087 = vcombine.low %v1048, %v1080
        %v1088 = vcombine.high %v1048, %v1080
        %v1089 = vcombine.low %v522, %v530
        %v1090 = vcombine.high %v522, %v530
        %v1092 = vunpack.c.l.s4 1983009808
        %v1093 = vunpack.c.0.s8 %v1092
        %v1094 = vlaneseq
        %v1095 = vshrl.u32 %v1094, 7
        %v1096 = vsub.s32 %v1093, %v1095
        %v1097 = vrot.slane %v1089, %v1096
        %v1099 = vunpack.c.l.s4 1983009808
        %v1100 = vunpack.c.0.s8 %v1099
        %v1101 = vlaneseq
        %v1102 = vshrl.u32 %v1101, 7
        %v1103 = vsub.s32 %v1100, %v1102
        %v1104 = vrot.slane %v1090, %v1103
        %v1105 = vcombine.low %v526, %v534
        %v1106 = vcombine.high %v526, %v534
        %v1108 = vunpack.c.l.s4 1983009808
        %v1109 = vunpack.c.0.s8 %v1108
        %v1110 = vlaneseq
        %v1111 = vshrl.u32 %v1110, 7
        %v1112 = vsub.s32 %v1109, %v1111
        %v1113 = vrot.slane %v1105, %v1112
        %v1115 = vunpack.c.l.s4 1983009808
        %v1116 = vunpack.c.0.s8 %v1115
        %v1117 = vlaneseq
        %v1118 = vshrl.u32 %v1117, 7
        %v1119 = vsub.s32 %v1116, %v1118
        %v1120 = vrot.slane %v1106, %v1119
        %v1121 = vcombine.low %v1097, %v1113
        %v1122 = vcombine.high %v1097, %v1113
        %v1124 = vunpack.c.l.s4 1934713408
        %v1125 = vunpack.c.0.s8 %v1124
        %v1126 = vlaneseq
        %v1127 = vshrl.u32 %v1126, 7
        %v1128 = vsub.s32 %v1125, %v1127
        %v1129 = vrot.slane %v1121, %v1128
        %v1131 = vunpack.c.l.s4 1934713408
        %v1132 = vunpack.c.0.s8 %v1131
        %v1133 = vlaneseq
        %v1134 = vshrl.u32 %v1133, 7
        %v1135 = vsub.s32 %v1132, %v1134
        %v1136 = vrot.slane %v1122, %v1135
        %v1137 = vcombine.low %v1104, %v1120
        %v1138 = vcombine.high %v1104, %v1120
        %v1140 = vunpack.c.l.s4 1934713408
        %v1141 = vunpack.c.0.s8 %v1140
        %v1142 = vlaneseq
        %v1143 = vshrl.u32 %v1142, 7
        %v1144 = vsub.s32 %v1141, %v1143
        %v1145 = vrot.slane %v1137, %v1144
        %v1147 = vunpack.c.l.s4 1934713408
        %v1148 = vunpack.c.0.s8 %v1147
        %v1149 = vlaneseq
        %v1150 = vshrl.u32 %v1149, 7
        %v1151 = vsub.s32 %v1148, %v1150
        %v1152 = vrot.slane %v1138, %v1151
        %v1153 = vcombine.high %v1129, 0.0
        %v1154 = vcombine.high %v1136, 0.0
        %v1155 = vcombine.high %v1145, 0.0
        %v1156 = vcombine.high %v1152, 0.0
        %v1157 = vcombine.low %v320, %v326
        %v1158 = vcombine.high %v320, %v326
        %v1160 = vunpack.c.l.s4 1983009808
        %v1161 = vunpack.c.0.s8 %v1160
        %v1162 = vlaneseq
        %v1163 = vshrl.u32 %v1162, 7
        %v1164 = vsub.s32 %v1161, %v1163
        %v1165 = vrot.slane %v1157, %v1164
        %v1167 = vunpack.c.l.s4 1983009808
        %v1168 = vunpack.c.0.s8 %v1167
        %v1169 = vlaneseq
        %v1170 = vshrl.u32 %v1169, 7
        %v1171 = vsub.s32 %v1168, %v1170
        %v1172 = vrot.slane %v1158, %v1171
        %v1173 = vcombine.low %v323, %v329
        %v1174 = vcombine.high %v323, %v329
        %v1176 = vunpack.c.l.s4 1983009808
        %v1177 = vunpack.c.0.s8 %v1176
        %v1178 = vlaneseq
        %v1179 = vshrl.u32 %v1178, 7
        %v1180 = vsub.s32 %v1177, %v1179
        %v1181 = vrot.slane %v1173, %v1180
        %v1183 = vunpack.c.l.s4 1983009808
        %v1184 = vunpack.c.0.s8 %v1183
        %v1185 = vlaneseq
        %v1186 = vshrl.u32 %v1185, 7
        %v1187 = vsub.s32 %v1184, %v1186
        %v1188 = vrot.slane %v1174, %v1187
        %v1189 = vcombine.low %v342, %v350
        %v1190 = vcombine.high %v342, %v350
        %v1192 = vunpack.c.l.s4 1983009808
        %v1193 = vunpack.c.0.s8 %v1192
        %v1194 = vlaneseq
        %v1195 = vshrl.u32 %v1194, 7
        %v1196 = vsub.s32 %v1193, %v1195
        %v1197 = vrot.slane %v1189, %v1196
        %v1199 = vunpack.c.l.s4 1983009808
        %v1200 = vunpack.c.0.s8 %v1199
        %v1201 = vlaneseq
        %v1202 = vshrl.u32 %v1201, 7
        %v1203 = vsub.s32 %v1200, %v1202
        %v1204 = vrot.slane %v1190, %v1203
        %v1205 = vcombine.low %v346, %v354
        %v1206 = vcombine.high %v346, %v354
        %v1208 = vunpack.c.l.s4 1983009808
        %v1209 = vunpack.c.0.s8 %v1208
        %v1210 = vlaneseq
        %v1211 = vshrl.u32 %v1210, 7
        %v1212 = vsub.s32 %v1209, %v1211
        %v1213 = vrot.slane %v1205, %v1212
        %v1215 = vunpack.c.l.s4 1983009808
        %v1216 = vunpack.c.0.s8 %v1215
        %v1217 = vlaneseq
        %v1218 = vshrl.u32 %v1217, 7
        %v1219 = vsub.s32 %v1216, %v1218
        %v1220 = vrot.slane %v1206, %v1219
        %v1221 = vcombine.low %v1165, %v1181
        %v1222 = vcombine.high %v1165, %v1181
        %v1224 = vunpack.c.l.s4 1934713408
        %v1225 = vunpack.c.0.s8 %v1224
        %v1226 = vlaneseq
        %v1227 = vshrl.u32 %v1226, 7
        %v1228 = vsub.s32 %v1225, %v1227
        %v1229 = vrot.slane %v1221, %v1228
        %v1231 = vunpack.c.l.s4 1934713408
        %v1232 = vunpack.c.0.s8 %v1231
        %v1233 = vlaneseq
        %v1234 = vshrl.u32 %v1233, 7
        %v1235 = vsub.s32 %v1232, %v1234
        %v1236 = vrot.slane %v1222, %v1235
        %v1237 = vcombine.low %v1172, %v1188
        %v1238 = vcombine.high %v1172, %v1188
        %v1240 = vunpack.c.l.s4 1934713408
        %v1241 = vunpack.c.0.s8 %v1240
        %v1242 = vlaneseq
        %v1243 = vshrl.u32 %v1242, 7
        %v1244 = vsub.s32 %v1241, %v1243
        %v1245 = vrot.slane %v1237, %v1244
        %v1247 = vunpack.c.l.s4 1934713408
        %v1248 = vunpack.c.0.s8 %v1247
        %v1249 = vlaneseq
        %v1250 = vshrl.u32 %v1249, 7
        %v1251 = vsub.s32 %v1248, %v1250
        %v1252 = vrot.slane %v1238, %v1251
        %v1253 = vcombine.low %v1197, %v1213
        %v1254 = vcombine.high %v1197, %v1213
        %v1256 = vunpack.c.l.s4 1934713408
        %v1257 = vunpack.c.0.s8 %v1256
        %v1258 = vlaneseq
        %v1259 = vshrl.u32 %v1258, 7
        %v1260 = vsub.s32 %v1257, %v1259
        %v1261 = vrot.slane %v1253, %v1260
        %v1263 = vunpack.c.l.s4 1934713408
        %v1264 = vunpack.c.0.s8 %v1263
        %v1265 = vlaneseq
        %v1266 = vshrl.u32 %v1265, 7
        %v1267 = vsub.s32 %v1264, %v1266
        %v1268 = vrot.slane %v1254, %v1267
        %v1269 = vcombine.low %v1204, %v1220
        %v1270 = vcombine.high %v1204, %v1220
        %v1272 = vunpack.c.l.s4 1934713408
        %v1273 = vunpack.c.0.s8 %v1272
        %v1274 = vlaneseq
        %v1275 = vshrl.u32 %v1274, 7
        %v1276 = vsub.s32 %v1273, %v1275
        %v1277 = vrot.slane %v1269, %v1276
        %v1279 = vunpack.c.l.s4 1934713408
        %v1280 = vunpack.c.0.s8 %v1279
        %v1281 = vlaneseq
        %v1282 = vshrl.u32 %v1281, 7
        %v1283 = vsub.s32 %v1280, %v1282
        %v1284 = vrot.slane %v1270, %v1283
        %v1285 = vcombine.low %v1229, %v1261
        %v1286 = vcombine.high %v1229, %v1261
        %v1287 = vcombine.low %v1236, %v1268
        %v1288 = vcombine.high %v1236, %v1268
        %v1289 = vcombine.low %v1245, %v1277
        %v1290 = vcombine.high %v1245, %v1277
        %v1291 = vcombine.low %v1252, %v1284
        %v1292 = vcombine.high %v1252, %v1284
        %v1293 = vcombine.low %v366, %v374
        %v1294 = vcombine.high %v366, %v374
        %v1296 = vunpack.c.l.s4 1983009808
        %v1297 = vunpack.c.0.s8 %v1296
        %v1298 = vlaneseq
        %v1299 = vshrl.u32 %v1298, 7
        %v1300 = vsub.s32 %v1297, %v1299
        %v1301 = vrot.slane %v1293, %v1300
        %v1303 = vunpack.c.l.s4 1983009808
        %v1304 = vunpack.c.0.s8 %v1303
        %v1305 = vlaneseq
        %v1306 = vshrl.u32 %v1305, 7
        %v1307 = vsub.s32 %v1304, %v1306
        %v1308 = vrot.slane %v1294, %v1307
        %v1309 = vcombine.low %v370, %v378
        %v1310 = vcombine.high %v370, %v378
        %v1312 = vunpack.c.l.s4 1983009808
        %v1313 = vunpack.c.0.s8 %v1312
        %v1314 = vlaneseq
        %v1315 = vshrl.u32 %v1314, 7
        %v1316 = vsub.s32 %v1313, %v1315
        %v1317 = vrot.slane %v1309, %v1316
        %v1319 = vunpack.c.l.s4 1983009808
        %v1320 = vunpack.c.0.s8 %v1319
        %v1321 = vlaneseq
        %v1322 = vshrl.u32 %v1321, 7
        %v1323 = vsub.s32 %v1320, %v1322
        %v1324 = vrot.slane %v1310, %v1323
        %v1325 = vcombine.low %v396, %v406
        %v1326 = vcombine.high %v396, %v406
        %v1328 = vunpack.c.l.s4 1983009808
        %v1329 = vunpack.c.0.s8 %v1328
        %v1330 = vlaneseq
        %v1331 = vshrl.u32 %v1330, 7
        %v1332 = vsub.s32 %v1329, %v1331
        %v1333 = vrot.slane %v1325, %v1332
        %v1335 = vunpack.c.l.s4 1983009808
        %v1336 = vunpack.c.0.s8 %v1335
        %v1337 = vlaneseq
        %v1338 = vshrl.u32 %v1337, 7
        %v1339 = vsub.s32 %v1336, %v1338
        %v1340 = vrot.slane %v1326, %v1339
        %v1341 = vcombine.low %v401, %v411
        %v1342 = vcombine.high %v401, %v411
        %v1344 = vunpack.c.l.s4 1983009808
        %v1345 = vunpack.c.0.s8 %v1344
        %v1346 = vlaneseq
        %v1347 = vshrl.u32 %v1346, 7
        %v1348 = vsub.s32 %v1345, %v1347
        %v1349 = vrot.slane %v1341, %v1348
        %v1351 = vunpack.c.l.s4 1983009808
        %v1352 = vunpack.c.0.s8 %v1351
        %v1353 = vlaneseq
        %v1354 = vshrl.u32 %v1353, 7
        %v1355 = vsub.s32 %v1352, %v1354
        %v1356 = vrot.slane %v1342, %v1355
        %v1357 = vcombine.low %v1301, %v1317
        %v1358 = vcombine.high %v1301, %v1317
        %v1360 = vunpack.c.l.s4 1934713408
        %v1361 = vunpack.c.0.s8 %v1360
        %v1362 = vlaneseq
        %v1363 = vshrl.u32 %v1362, 7
        %v1364 = vsub.s32 %v1361, %v1363
        %v1365 = vrot.slane %v1357, %v1364
        %v1367 = vunpack.c.l.s4 1934713408
        %v1368 = vunpack.c.0.s8 %v1367
        %v1369 = vlaneseq
        %v1370 = vshrl.u32 %v1369, 7
        %v1371 = vsub.s32 %v1368, %v1370
        %v1372 = vrot.slane %v1358, %v1371
        %v1373 = vcombine.low %v1308, %v1324
        %v1374 = vcombine.high %v1308, %v1324
        %v1376 = vunpack.c.l.s4 1934713408
        %v1377 = vunpack.c.0.s8 %v1376
        %v1378 = vlaneseq
        %v1379 = vshrl.u32 %v1378, 7
        %v1380 = vsub.s32 %v1377, %v1379
        %v1381 = vrot.slane %v1373, %v1380
        %v1383 = vunpack.c.l.s4 1934713408
        %v1384 = vunpack.c.0.s8 %v1383
        %v1385 = vlaneseq
        %v1386 = vshrl.u32 %v1385, 7
        %v1387 = vsub.s32 %v1384, %v1386
        %v1388 = vrot.slane %v1374, %v1387
        %v1389 = vcombine.low %v1333, %v1349
        %v1390 = vcombine.high %v1333, %v1349
        %v1392 = vunpack.c.l.s4 1934713408
        %v1393 = vunpack.c.0.s8 %v1392
        %v1394 = vlaneseq
        %v1395 = vshrl.u32 %v1394, 7
        %v1396 = vsub.s32 %v1393, %v1395
        %v1397 = vrot.slane %v1389, %v1396
        %v1399 = vunpack.c.l.s4 1934713408
        %v1400 = vunpack.c.0.s8 %v1399
        %v1401 = vlaneseq
        %v1402 = vshrl.u32 %v1401, 7
        %v1403 = vsub.s32 %v1400, %v1402
        %v1404 = vrot.slane %v1390, %v1403
        %v1405 = vcombine.low %v1340, %v1356
        %v1406 = vcombine.high %v1340, %v1356
        %v1408 = vunpack.c.l.s4 1934713408
        %v1409 = vunpack.c.0.s8 %v1408
        %v1410 = vlaneseq
        %v1411 = vshrl.u32 %v1410, 7
        %v1412 = vsub.s32 %v1409, %v1411
        %v1413 = vrot.slane %v1405, %v1412
        %v1415 = vunpack.c.l.s4 1934713408
        %v1416 = vunpack.c.0.s8 %v1415
        %v1417 = vlaneseq
        %v1418 = vshrl.u32 %v1417, 7
        %v1419 = vsub.s32 %v1416, %v1418
        %v1420 = vrot.slane %v1406, %v1419
        %v1421 = vcombine.low %v1365, %v1397
        %v1422 = vcombine.high %v1365, %v1397
        %v1423 = vcombine.low %v1372, %v1404
        %v1424 = vcombine.high %v1372, %v1404
        %v1425 = vcombine.low %v1381, %v1413
        %v1426 = vcombine.high %v1381, %v1413
        %v1427 = vcombine.low %v1388, %v1420
        %v1428 = vcombine.high %v1388, %v1420
        %v1429 = vcombine.low %v423, %v431
        %v1430 = vcombine.high %v423, %v431
        %v1432 = vunpack.c.l.s4 1983009808
        %v1433 = vunpack.c.0.s8 %v1432
        %v1434 = vlaneseq
        %v1435 = vshrl.u32 %v1434, 7
        %v1436 = vsub.s32 %v1433, %v1435
        %v1437 = vrot.slane %v1429, %v1436
        %v1439 = vunpack.c.l.s4 1983009808
        %v1440 = vunpack.c.0.s8 %v1439
        %v1441 = vlaneseq
        %v1442 = vshrl.u32 %v1441, 7
        %v1443 = vsub.s32 %v1440, %v1442
        %v1444 = vrot.slane %v1430, %v1443
        %v1445 = vcombine.low %v427, %v435
        %v1446 = vcombine.high %v427, %v435
        %v1448 = vunpack.c.l.s4 1983009808
        %v1449 = vunpack.c.0.s8 %v1448
        %v1450 = vlaneseq
        %v1451 = vshrl.u32 %v1450, 7
        %v1452 = vsub.s32 %v1449, %v1451
        %v1453 = vrot.slane %v1445, %v1452
        %v1455 = vunpack.c.l.s4 1983009808
        %v1456 = vunpack.c.0.s8 %v1455
        %v1457 = vlaneseq
        %v1458 = vshrl.u32 %v1457, 7
        %v1459 = vsub.s32 %v1456, %v1458
        %v1460 = vrot.slane %v1446, %v1459
        %v1461 = vcombine.low %v447, %v455
        %v1462 = vcombine.high %v447, %v455
        %v1464 = vunpack.c.l.s4 1983009808
        %v1465 = vunpack.c.0.s8 %v1464
        %v1466 = vlaneseq
        %v1467 = vshrl.u32 %v1466, 7
        %v1468 = vsub.s32 %v1465, %v1467
        %v1469 = vrot.slane %v1461, %v1468
        %v1471 = vunpack.c.l.s4 1983009808
        %v1472 = vunpack.c.0.s8 %v1471
        %v1473 = vlaneseq
        %v1474 = vshrl.u32 %v1473, 7
        %v1475 = vsub.s32 %v1472, %v1474
        %v1476 = vrot.slane %v1462, %v1475
        %v1477 = vcombine.low %v451, %v459
        %v1478 = vcombine.high %v451, %v459
        %v1480 = vunpack.c.l.s4 1983009808
        %v1481 = vunpack.c.0.s8 %v1480
        %v1482 = vlaneseq
        %v1483 = vshrl.u32 %v1482, 7
        %v1484 = vsub.s32 %v1481, %v1483
        %v1485 = vrot.slane %v1477, %v1484
        %v1487 = vunpack.c.l.s4 1983009808
        %v1488 = vunpack.c.0.s8 %v1487
        %v1489 = vlaneseq
        %v1490 = vshrl.u32 %v1489, 7
        %v1491 = vsub.s32 %v1488, %v1490
        %v1492 = vrot.slane %v1478, %v1491
        %v1493 = vcombine.low %v1437, %v1453
        %v1494 = vcombine.high %v1437, %v1453
        %v1496 = vunpack.c.l.s4 1934713408
        %v1497 = vunpack.c.0.s8 %v1496
        %v1498 = vlaneseq
        %v1499 = vshrl.u32 %v1498, 7
        %v1500 = vsub.s32 %v1497, %v1499
        %v1501 = vrot.slane %v1493, %v1500
        %v1503 = vunpack.c.l.s4 1934713408
        %v1504 = vunpack.c.0.s8 %v1503
        %v1505 = vlaneseq
        %v1506 = vshrl.u32 %v1505, 7
        %v1507 = vsub.s32 %v1504, %v1506
        %v1508 = vrot.slane %v1494, %v1507
        %v1509 = vcombine.low %v1444, %v1460
        %v1510 = vcombine.high %v1444, %v1460
        %v1512 = vunpack.c.l.s4 1934713408
        %v1513 = vunpack.c.0.s8 %v1512
        %v1514 = vlaneseq
        %v1515 = vshrl.u32 %v1514, 7
        %v1516 = vsub.s32 %v1513, %v1515
        %v1517 = vrot.slane %v1509, %v1516
        %v1519 = vunpack.c.l.s4 1934713408
        %v1520 = vunpack.c.0.s8 %v1519
        %v1521 = vlaneseq
        %v1522 = vshrl.u32 %v1521, 7
        %v1523 = vsub.s32 %v1520, %v1522
        %v1524 = vrot.slane %v1510, %v1523
        %v1525 = vcombine.low %v1469, %v1485
        %v1526 = vcombine.high %v1469, %v1485
        %v1528 = vunpack.c.l.s4 1934713408
        %v1529 = vunpack.c.0.s8 %v1528
        %v1530 = vlaneseq
        %v1531 = vshrl.u32 %v1530, 7
        %v1532 = vsub.s32 %v1529, %v1531
        %v1533 = vrot.slane %v1525, %v1532
        %v1535 = vunpack.c.l.s4 1934713408
        %v1536 = vunpack.c.0.s8 %v1535
        %v1537 = vlaneseq
        %v1538 = vshrl.u32 %v1537, 7
        %v1539 = vsub.s32 %v1536, %v1538
        %v1540 = vrot.slane %v1526, %v1539
        %v1541 = vcombine.low %v1476, %v1492
        %v1542 = vcombine.high %v1476, %v1492
        %v1544 = vunpack.c.l.s4 1934713408
        %v1545 = vunpack.c.0.s8 %v1544
        %v1546 = vlaneseq
        %v1547 = vshrl.u32 %v1546, 7
        %v1548 = vsub.s32 %v1545, %v1547
        %v1549 = vrot.slane %v1541, %v1548
        %v1551 = vunpack.c.l.s4 1934713408
        %v1552 = vunpack.c.0.s8 %v1551
        %v1553 = vlaneseq
        %v1554 = vshrl.u32 %v1553, 7
        %v1555 = vsub.s32 %v1552, %v1554
        %v1556 = vrot.slane %v1542, %v1555
        %v1557 = vcombine.low %v1501, %v1533
        %v1558 = vcombine.high %v1501, %v1533
        %v1559 = vcombine.low %v1508, %v1540
        %v1560 = vcombine.high %v1508, %v1540
        %v1561 = vcombine.low %v1517, %v1549
        %v1562 = vcombine.high %v1517, %v1549
        %v1563 = vcombine.low %v1524, %v1556
        %v1564 = vcombine.high %v1524, %v1556
        %v1565 = vcombine.low %v473, %v483
        %v1566 = vcombine.high %v473, %v483
        %v1568 = vunpack.c.l.s4 1983009808
        %v1569 = vunpack.c.0.s8 %v1568
        %v1570 = vlaneseq
        %v1571 = vshrl.u32 %v1570, 7
        %v1572 = vsub.s32 %v1569, %v1571
        %v1573 = vrot.slane %v1565, %v1572
        %v1575 = vunpack.c.l.s4 1983009808
        %v1576 = vunpack.c.0.s8 %v1575
        %v1577 = vlaneseq
        %v1578 = vshrl.u32 %v1577, 7
        %v1579 = vsub.s32 %v1576, %v1578
        %v1580 = vrot.slane %v1566, %v1579
        %v1581 = vcombine.low %v478, %v488
        %v1582 = vcombine.high %v478, %v488
        %v1584 = vunpack.c.l.s4 1983009808
        %v1585 = vunpack.c.0.s8 %v1584
        %v1586 = vlaneseq
        %v1587 = vshrl.u32 %v1586, 7
        %v1588 = vsub.s32 %v1585, %v1587
        %v1589 = vrot.slane %v1581, %v1588
        %v1591 = vunpack.c.l.s4 1983009808
        %v1592 = vunpack.c.0.s8 %v1591
        %v1593 = vlaneseq
        %v1594 = vshrl.u32 %v1593, 7
        %v1595 = vsub.s32 %v1592, %v1594
        %v1596 = vrot.slane %v1582, %v1595
        %v1597 = vcombine.low %v500, %v508
        %v1598 = vcombine.high %v500, %v508
        %v1600 = vunpack.c.l.s4 1983009808
        %v1601 = vunpack.c.0.s8 %v1600
        %v1602 = vlaneseq
        %v1603 = vshrl.u32 %v1602, 7
        %v1604 = vsub.s32 %v1601, %v1603
        %v1605 = vrot.slane %v1597, %v1604
        %v1607 = vunpack.c.l.s4 1983009808
        %v1608 = vunpack.c.0.s8 %v1607
        %v1609 = vlaneseq
        %v1610 = vshrl.u32 %v1609, 7
        %v1611 = vsub.s32 %v1608, %v1610
        %v1612 = vrot.slane %v1598, %v1611
        %v1613 = vcombine.low %v504, %v512
        %v1614 = vcombine.high %v504, %v512
        %v1616 = vunpack.c.l.s4 1983009808
        %v1617 = vunpack.c.0.s8 %v1616
        %v1618 = vlaneseq
        %v1619 = vshrl.u32 %v1618, 7
        %v1620 = vsub.s32 %v1617, %v1619
        %v1621 = vrot.slane %v1613, %v1620
        %v1623 = vunpack.c.l.s4 1983009808
        %v1624 = vunpack.c.0.s8 %v1623
        %v1625 = vlaneseq
        %v1626 = vshrl.u32 %v1625, 7
        %v1627 = vsub.s32 %v1624, %v1626
        %v1628 = vrot.slane %v1614, %v1627
        %v1629 = vcombine.low %v1573, %v1589
        %v1630 = vcombine.high %v1573, %v1589
        %v1632 = vunpack.c.l.s4 1934713408
        %v1633 = vunpack.c.0.s8 %v1632
        %v1634 = vlaneseq
        %v1635 = vshrl.u32 %v1634, 7
        %v1636 = vsub.s32 %v1633, %v1635
        %v1637 = vrot.slane %v1629, %v1636
        %v1639 = vunpack.c.l.s4 1934713408
        %v1640 = vunpack.c.0.s8 %v1639
        %v1641 = vlaneseq
        %v1642 = vshrl.u32 %v1641, 7
        %v1643 = vsub.s32 %v1640, %v1642
        %v1644 = vrot.slane %v1630, %v1643
        %v1645 = vcombine.low %v1580, %v1596
        %v1646 = vcombine.high %v1580, %v1596
        %v1648 = vunpack.c.l.s4 1934713408
        %v1649 = vunpack.c.0.s8 %v1648
        %v1650 = vlaneseq
        %v1651 = vshrl.u32 %v1650, 7
        %v1652 = vsub.s32 %v1649, %v1651
        %v1653 = vrot.slane %v1645, %v1652
        %v1655 = vunpack.c.l.s4 1934713408
        %v1656 = vunpack.c.0.s8 %v1655
        %v1657 = vlaneseq
        %v1658 = vshrl.u32 %v1657, 7
        %v1659 = vsub.s32 %v1656, %v1658
        %v1660 = vrot.slane %v1646, %v1659
        %v1661 = vcombine.low %v1605, %v1621
        %v1662 = vcombine.high %v1605, %v1621
        %v1664 = vunpack.c.l.s4 1934713408
        %v1665 = vunpack.c.0.s8 %v1664
        %v1666 = vlaneseq
        %v1667 = vshrl.u32 %v1666, 7
        %v1668 = vsub.s32 %v1665, %v1667
        %v1669 = vrot.slane %v1661, %v1668
        %v1671 = vunpack.c.l.s4 1934713408
        %v1672 = vunpack.c.0.s8 %v1671
        %v1673 = vlaneseq
        %v1674 = vshrl.u32 %v1673, 7
        %v1675 = vsub.s32 %v1672, %v1674
        %v1676 = vrot.slane %v1662, %v1675
        %v1677 = vcombine.low %v1612, %v1628
        %v1678 = vcombine.high %v1612, %v1628
        %v1680 = vunpack.c.l.s4 1934713408
        %v1681 = vunpack.c.0.s8 %v1680
        %v1682 = vlaneseq
        %v1683 = vshrl.u32 %v1682, 7
        %v1684 = vsub.s32 %v1681, %v1683
        %v1685 = vrot.slane %v1677, %v1684
        %v1687 = vunpack.c.l.s4 1934713408
        %v1688 = vunpack.c.0.s8 %v1687
        %v1689 = vlaneseq
        %v1690 = vshrl.u32 %v1689, 7
        %v1691 = vsub.s32 %v1688, %v1690
        %v1692 = vrot.slane %v1678, %v1691
        %v1693 = vcombine.low %v1637, %v1669
        %v1694 = vcombine.high %v1637, %v1669
        %v1695 = vcombine.low %v1644, %v1676
        %v1696 = vcombine.high %v1644, %v1676
        %v1697 = vcombine.low %v1653, %v1685
        %v1698 = vcombine.high %v1653, %v1685
        %v1699 = vcombine.low %v1660, %v1692
        %v1700 = vcombine.high %v1660, %v1692
        %v1701 = vcombine.low %v524, %v532
        %v1702 = vcombine.high %v524, %v532
        %v1704 = vunpack.c.l.s4 1983009808
        %v1705 = vunpack.c.0.s8 %v1704
        %v1706 = vlaneseq
        %v1707 = vshrl.u32 %v1706, 7
        %v1708 = vsub.s32 %v1705, %v1707
        %v1709 = vrot.slane %v1701, %v1708
        %v1711 = vunpack.c.l.s4 1983009808
        %v1712 = vunpack.c.0.s8 %v1711
        %v1713 = vlaneseq
        %v1714 = vshrl.u32 %v1713, 7
        %v1715 = vsub.s32 %v1712, %v1714
        %v1716 = vrot.slane %v1702, %v1715
        %v1717 = vcombine.low %v528, %v536
        %v1718 = vcombine.high %v528, %v536
        %v1720 = vunpack.c.l.s4 1983009808
        %v1721 = vunpack.c.0.s8 %v1720
        %v1722 = vlaneseq
        %v1723 = vshrl.u32 %v1722, 7
        %v1724 = vsub.s32 %v1721, %v1723
        %v1725 = vrot.slane %v1717, %v1724
        %v1727 = vunpack.c.l.s4 1983009808
        %v1728 = vunpack.c.0.s8 %v1727
        %v1729 = vlaneseq
        %v1730 = vshrl.u32 %v1729, 7
        %v1731 = vsub.s32 %v1728, %v1730
        %v1732 = vrot.slane %v1718, %v1731
        %v1733 = vcombine.low %v1709, %v1725
        %v1734 = vcombine.high %v1709, %v1725
        %v1736 = vunpack.c.l.s4 1934713408
        %v1737 = vunpack.c.0.s8 %v1736
        %v1738 = vlaneseq
        %v1739 = vshrl.u32 %v1738, 7
        %v1740 = vsub.s32 %v1737, %v1739
        %v1741 = vrot.slane %v1733, %v1740
        %v1743 = vunpack.c.l.s4 1934713408
        %v1744 = vunpack.c.0.s8 %v1743
        %v1745 = vlaneseq
        %v1746 = vshrl.u32 %v1745, 7
        %v1747 = vsub.s32 %v1744, %v1746
        %v1748 = vrot.slane %v1734, %v1747
        %v1749 = vcombine.low %v1716, %v1732
        %v1750 = vcombine.high %v1716, %v1732
        %v1752 = vunpack.c.l.s4 1934713408
        %v1753 = vunpack.c.0.s8 %v1752
        %v1754 = vlaneseq
        %v1755 = vshrl.u32 %v1754, 7
        %v1756 = vsub.s32 %v1753, %v1755
        %v1757 = vrot.slane %v1749, %v1756
        %v1759 = vunpack.c.l.s4 1934713408
        %v1760 = vunpack.c.0.s8 %v1759
        %v1761 = vlaneseq
        %v1762 = vshrl.u32 %v1761, 7
        %v1763 = vsub.s32 %v1760, %v1762
        %v1764 = vrot.slane %v1750, %v1763
        %v1765 = vcombine.high %v1741, 0.0
        %v1766 = vcombine.high %v1748, 0.0
        %v1767 = vcombine.high %v1757, 0.0
        %v1768 = vcombine.high %v1764, 0.0
        %1774 = vrot.lane.b32.xlu0 %v674, 16
        %v1775 = vpop.permute.xlu0 %1774
        %1776 = vrot.lane.b32.xlu0 %v810, 16
        %v1777 = vpop.permute.xlu0 %1776
        %1778 = vrot.lane.b32.xlu0 %v946, 16
        %v1779 = vpop.permute.xlu0 %1778
        %1780 = vrot.lane.b32.xlu0 %v1082, 16
        %v1781 = vpop.permute.xlu0 %1780
        %1782 = vrot.lane.b32.xlu0 %v1153, 16
        %v1783 = vpop.permute.xlu0 %1782
        %1794 = vrot.lane.b32.xlu0 %v675, 32
        %v1795 = vpop.permute.xlu0 %1794
        %1796 = vrot.lane.b32.xlu0 %v811, 32
        %v1797 = vpop.permute.xlu0 %1796
        %1798 = vrot.lane.b32.xlu0 %v947, 32
        %v1799 = vpop.permute.xlu0 %1798
        %1800 = vrot.lane.b32.xlu0 %v1083, 32
        %v1801 = vpop.permute.xlu0 %1800
        %1802 = vrot.lane.b32.xlu0 %v1136, 32
        %v1803 = vpop.permute.xlu0 %1802
        %1814 = vrot.lane.b32.xlu0 %v676, 48
        %v1815 = vpop.permute.xlu0 %1814
        %1816 = vrot.lane.b32.xlu0 %v812, 48
        %v1817 = vpop.permute.xlu0 %1816
        %1818 = vrot.lane.b32.xlu0 %v948, 48
        %v1819 = vpop.permute.xlu0 %1818
        %1820 = vrot.lane.b32.xlu0 %v1084, 48
        %v1821 = vpop.permute.xlu0 %1820
        %1822 = vrot.lane.b32.xlu0 %v1154, 48
        %v1823 = vpop.permute.xlu0 %1822
        %1834 = vrot.lane.b32.xlu0 %v677, 64
        %v1835 = vpop.permute.xlu0 %1834
        %1836 = vrot.lane.b32.xlu0 %v813, 64
        %v1837 = vpop.permute.xlu0 %1836
        %1838 = vrot.lane.b32.xlu0 %v949, 64
        %v1839 = vpop.permute.xlu0 %1838
        %1840 = vrot.lane.b32.xlu0 %v1085, 64
        %v1841 = vpop.permute.xlu0 %1840
        %1842 = vrot.lane.b32.xlu0 %v1145, 64
        %v1843 = vpop.permute.xlu0 %1842
        %1854 = vrot.lane.b32.xlu0 %v678, 80
        %v1855 = vpop.permute.xlu0 %1854
        %1856 = vrot.lane.b32.xlu0 %v814, 80
        %v1857 = vpop.permute.xlu0 %1856
        %1858 = vrot.lane.b32.xlu0 %v950, 80
        %v1859 = vpop.permute.xlu0 %1858
        %1860 = vrot.lane.b32.xlu0 %v1086, 80
        %v1861 = vpop.permute.xlu0 %1860
        %1862 = vrot.lane.b32.xlu0 %v1155, 80
        %v1863 = vpop.permute.xlu0 %1862
        %1874 = vrot.lane.b32.xlu0 %v679, 96
        %v1875 = vpop.permute.xlu0 %1874
        %1876 = vrot.lane.b32.xlu0 %v815, 96
        %v1877 = vpop.permute.xlu0 %1876
        %1878 = vrot.lane.b32.xlu0 %v951, 96
        %v1879 = vpop.permute.xlu0 %1878
        %1880 = vrot.lane.b32.xlu0 %v1087, 96
        %v1881 = vpop.permute.xlu0 %1880
        %1882 = vrot.lane.b32.xlu0 %v1152, 96
        %v1883 = vpop.permute.xlu0 %1882
        %1894 = vrot.lane.b32.xlu0 %v680, 112
        %v1895 = vpop.permute.xlu0 %1894
        %1896 = vrot.lane.b32.xlu0 %v816, 112
        %v1897 = vpop.permute.xlu0 %1896
        %1898 = vrot.lane.b32.xlu0 %v952, 112
        %v1899 = vpop.permute.xlu0 %1898
        %1900 = vrot.lane.b32.xlu0 %v1088, 112
        %v1901 = vpop.permute.xlu0 %1900
        %1902 = vrot.lane.b32.xlu0 %v1156, 112
        %v1903 = vpop.permute.xlu0 %1902
        %1914 = vrot.lane.b32.xlu0 %v1286, 16
        %v1915 = vpop.permute.xlu0 %1914
        %1916 = vrot.lane.b32.xlu0 %v1422, 16
        %v1917 = vpop.permute.xlu0 %1916
        %1918 = vrot.lane.b32.xlu0 %v1558, 16
        %v1919 = vpop.permute.xlu0 %1918
        %1920 = vrot.lane.b32.xlu0 %v1694, 16
        %v1921 = vpop.permute.xlu0 %1920
        %1922 = vrot.lane.b32.xlu0 %v1765, 16
        %v1923 = vpop.permute.xlu0 %1922
        %1934 = vrot.lane.b32.xlu0 %v1287, 32
        %v1935 = vpop.permute.xlu0 %1934
        %1936 = vrot.lane.b32.xlu0 %v1423, 32
        %v1937 = vpop.permute.xlu0 %1936
        %1938 = vrot.lane.b32.xlu0 %v1559, 32
        %v1939 = vpop.permute.xlu0 %1938
        %1940 = vrot.lane.b32.xlu0 %v1695, 32
        %v1941 = vpop.permute.xlu0 %1940
        %1942 = vrot.lane.b32.xlu0 %v1748, 32
        %v1943 = vpop.permute.xlu0 %1942
        %1954 = vrot.lane.b32.xlu0 %v1288, 48
        %v1955 = vpop.permute.xlu0 %1954
        %1956 = vrot.lane.b32.xlu0 %v1424, 48
        %v1957 = vpop.permute.xlu0 %1956
        %1958 = vrot.lane.b32.xlu0 %v1560, 48
        %v1959 = vpop.permute.xlu0 %1958
        %1960 = vrot.lane.b32.xlu0 %v1696, 48
        %v1961 = vpop.permute.xlu0 %1960
        %1962 = vrot.lane.b32.xlu0 %v1766, 48
        %v1963 = vpop.permute.xlu0 %1962
        %1974 = vrot.lane.b32.xlu0 %v1289, 64
        %v1975 = vpop.permute.xlu0 %1974
        %1976 = vrot.lane.b32.xlu0 %v1425, 64
        %v1977 = vpop.permute.xlu0 %1976
        %1978 = vrot.lane.b32.xlu0 %v1561, 64
        %v1979 = vpop.permute.xlu0 %1978
        %1980 = vrot.lane.b32.xlu0 %v1697, 64
        %v1981 = vpop.permute.xlu0 %1980
        %1982 = vrot.lane.b32.xlu0 %v1757, 64
        %v1983 = vpop.permute.xlu0 %1982
        %1994 = vrot.lane.b32.xlu0 %v1290, 80
        %v1995 = vpop.permute.xlu0 %1994
        %1996 = vrot.lane.b32.xlu0 %v1426, 80
        %v1997 = vpop.permute.xlu0 %1996
        %1998 = vrot.lane.b32.xlu0 %v1562, 80
        %v1999 = vpop.permute.xlu0 %1998
        %2000 = vrot.lane.b32.xlu0 %v1698, 80
        %v2001 = vpop.permute.xlu0 %2000
        %2002 = vrot.lane.b32.xlu0 %v1767, 80
        %v2003 = vpop.permute.xlu0 %2002
        %2014 = vrot.lane.b32.xlu0 %v1291, 96
        %v2015 = vpop.permute.xlu0 %2014
        %2016 = vrot.lane.b32.xlu0 %v1427, 96
        %v2017 = vpop.permute.xlu0 %2016
        %2018 = vrot.lane.b32.xlu0 %v1563, 96
        %v2019 = vpop.permute.xlu0 %2018
        %2020 = vrot.lane.b32.xlu0 %v1699, 96
        %v2021 = vpop.permute.xlu0 %2020
        %2022 = vrot.lane.b32.xlu0 %v1764, 96
        %v2023 = vpop.permute.xlu0 %2022
        %2034 = vrot.lane.b32.xlu0 %v1292, 112
        %v2035 = vpop.permute.xlu0 %2034
        %2036 = vrot.lane.b32.xlu0 %v1428, 112
        %v2037 = vpop.permute.xlu0 %2036
        %2038 = vrot.lane.b32.xlu0 %v1564, 112
        %v2039 = vpop.permute.xlu0 %2038
        %2040 = vrot.lane.b32.xlu0 %v1700, 112
        %v2041 = vpop.permute.xlu0 %2040
        %2042 = vrot.lane.b32.xlu0 %v1768, 112
        %v2043 = vpop.permute.xlu0 %2042
        %vm2049 = vcmask 130048
        %v2050 = vsel %vm2049, %v673, %v1775
        %v2051 = vsel %vm2049, %v809, %v1777
        %v2052 = vsel %vm2049, %v945, %v1779
        %v2053 = vsel %vm2049, %v1081, %v1781
        %v2054 = vsel %vm2049, %v1129, %v1783
        %vm2055 = vcmask 261120
        %v2056 = vsel %vm2055, %v2050, %v1795
        %v2057 = vsel %vm2055, %v2051, %v1797
        %v2058 = vsel %vm2055, %v2052, %v1799
        %v2059 = vsel %vm2055, %v2053, %v1801
        %v2060 = vsel %vm2055, %v2054, %v1803
        %vm2061 = vcmask 392192
        %v2062 = vsel %vm2061, %v2056, %v1815
        %v2063 = vsel %vm2061, %v2057, %v1817
        %v2064 = vsel %vm2061, %v2058, %v1819
        %v2065 = vsel %vm2061, %v2059, %v1821
        %v2066 = vsel %vm2061, %v2060, %v1823
        %vm2067 = vcmask 523264
        %v2068 = vsel %vm2067, %v2062, %v1835
        %v2069 = vsel %vm2067, %v2063, %v1837
        %v2070 = vsel %vm2067, %v2064, %v1839
        %v2071 = vsel %vm2067, %v2065, %v1841
        %v2072 = vsel %vm2067, %v2066, %v1843
        %vm2073 = vcmask 654336
        %v2074 = vsel %vm2073, %v2068, %v1855
        %v2075 = vsel %vm2073, %v2069, %v1857
        %v2076 = vsel %vm2073, %v2070, %v1859
        %v2077 = vsel %vm2073, %v2071, %v1861
        %v2078 = vsel %vm2073, %v2072, %v1863
        %vm2079 = vcmask 785408
        %v2080 = vsel %vm2079, %v2074, %v1875
        %v2081 = vsel %vm2079, %v2075, %v1877
        %v2082 = vsel %vm2079, %v2076, %v1879
        %v2083 = vsel %vm2079, %v2077, %v1881
        %v2084 = vsel %vm2079, %v2078, %v1883
        %vm2085 = vcmask 916480
        %v2086 = vsel %vm2085, %v2080, %v1895
        %v2087 = vsel %vm2085, %v2081, %v1897
        %v2088 = vsel %vm2085, %v2082, %v1899
        %v2089 = vsel %vm2085, %v2083, %v1901
        %v2090 = vsel %vm2085, %v2084, %v1903
        %v2091 = vsel %vm2049, %v1285, %v1915
        %v2092 = vsel %vm2049, %v1421, %v1917
        %v2093 = vsel %vm2049, %v1557, %v1919
        %v2094 = vsel %vm2049, %v1693, %v1921
        %v2095 = vsel %vm2049, %v1741, %v1923
        %v2096 = vsel %vm2055, %v2091, %v1935
        %v2097 = vsel %vm2055, %v2092, %v1937
        %v2098 = vsel %vm2055, %v2093, %v1939
        %v2099 = vsel %vm2055, %v2094, %v1941
        %v2100 = vsel %vm2055, %v2095, %v1943
        %v2101 = vsel %vm2061, %v2096, %v1955
        %v2102 = vsel %vm2061, %v2097, %v1957
        %v2103 = vsel %vm2061, %v2098, %v1959
        %v2104 = vsel %vm2061, %v2099, %v1961
        %v2105 = vsel %vm2061, %v2100, %v1963
        %v2106 = vsel %vm2067, %v2101, %v1975
        %v2107 = vsel %vm2067, %v2102, %v1977
        %v2108 = vsel %vm2067, %v2103, %v1979
        %v2109 = vsel %vm2067, %v2104, %v1981
        %v2110 = vsel %vm2067, %v2105, %v1983
        %v2111 = vsel %vm2073, %v2106, %v1995
        %v2112 = vsel %vm2073, %v2107, %v1997
        %v2113 = vsel %vm2073, %v2108, %v1999
        %v2114 = vsel %vm2073, %v2109, %v2001
        %v2115 = vsel %vm2073, %v2110, %v2003
        %v2116 = vsel %vm2079, %v2111, %v2015
        %v2117 = vsel %vm2079, %v2112, %v2017
        %v2118 = vsel %vm2079, %v2113, %v2019
        %v2119 = vsel %vm2079, %v2114, %v2021
        %v2120 = vsel %vm2079, %v2115, %v2023
        %v2121 = vsel %vm2085, %v2116, %v2035
        %v2122 = vsel %vm2085, %v2117, %v2037
        %v2123 = vsel %vm2085, %v2118, %v2039
        %v2124 = vsel %vm2085, %v2119, %v2041
        %v2125 = vsel %vm2085, %v2120, %v2043
        %v2126 = vld [vmem:[%s1] sm:$0xff]
        %vm2127 = vcmask 293888
        %v2129 = vsel %vm2127, %v2126, 0
        %vm2131 = vcmask 1043456
        %v2133 = vsel %vm2131, %v2090, 0
        %v2136 = vsel %vm2131, %v2125, 0
        %2138 = vmatprep.subr.mxu0 0.0
        %2139 = vmatpush1.msra.mxu0 0.0
        %2140 = vmatprep.subr.mxu0 0.0
        %2141 = vmatpush1.msra.mxu0 0.0
        %2142 = vmatprep.subr.mxu0 0.0
        %2143 = vmatpush1.msra.mxu0 0.0
        %2144 = vmatprep.subr.mxu0 0.0
        %2145 = vmatpush1.msra.mxu0 0.0
        %2146 = vmatprep.subr.mxu0 0.0
        %2147 = vmatpush1.msra.mxu0 0.0
        %2148 = vmatprep.subr.mxu0 0.0
        %2149 = vmatpush1.msra.mxu0 0.0
        %2150 = vmatprep.subr.mxu0 0.0
        %2151 = vmatpush1.msra.mxu0 0.0
        %2152 = vmatprep.subr.mxu0 0.0
        %2153 = vmatpush1.msra.mxu0 0.0
        %2154 = vmatprep.subr.mxu0 0.0
        %2155 = vmatpush1.msra.mxu0 0.0
        %2156 = vmatprep.subr.mxu0 0.0
        %2157 = vmatpush1.msra.mxu0 0.0
        %2158 = vmatprep.subr.mxu0 0.0
        %2159 = vmatpush1.msra.mxu0 0.0
        %2160 = vmatprep.subr.mxu0 %v2136
        %2161 = vmatpush1.msra.mxu0 %v2133
        %2162 = vmatprep.subr.mxu0 %v2124
        %2163 = vmatpush1.msra.mxu0 %v2089
        %2164 = vmatprep.subr.mxu0 %v2123
        %2165 = vmatpush1.msra.mxu0 %v2088
        %2166 = vmatprep.subr.mxu0 %v2122
        %2167 = vmatpush1.msra.mxu0 %v2087
        %2168 = vmatprep.subr.mxu0 %v2121
        %2169 = vmatpush1.msra.mxu0 %v2086
        %2170 = vmatprep.subr.mxu0 0.0
        %2171 = vmatpush2.msra.mxu0 0.0
        %2172 = vmatprep.subr.mxu0 0.0
        %2173 = vmatpush2.msra.mxu0 0.0
        %2174 = vmatprep.subr.mxu0 0.0
        %2175 = vmatpush2.msra.mxu0 0.0
        %2176 = vmatprep.subr.mxu0 0.0
        %2177 = vmatpush2.msra.mxu0 0.0
        %2178 = vmatprep.subr.mxu0 0.0
        %2179 = vmatpush2.msra.mxu0 0.0
        %2180 = vmatprep.subr.mxu0 0.0
        %2181 = vmatpush2.msra.mxu0 0.0
        %2182 = vmatprep.subr.mxu0 0.0
        %2183 = vmatpush2.msra.mxu0 0.0
        %2184 = vmatprep.subr.mxu0 0.0
        %2185 = vmatpush2.msra.mxu0 0.0
        %2186 = vmatprep.subr.mxu0 0.0
        %2187 = vmatpush2.msra.mxu0 0.0
        %2188 = vmatprep.subr.mxu0 0.0
        %2189 = vmatpush2.msra.mxu0 0.0
        %2190 = vmatprep.subr.mxu0 0.0
        %2191 = vmatpush2.msra.mxu0 0.0
        %2192 = vmatprep.subr.mxu0 0.0
        %2193 = vmatpush2.msra.mxu0 0.0
        %2194 = vmatprep.subr.mxu0 0.0
        %2195 = vmatpush2.msra.mxu0 0.0
        %2196 = vmatprep.subr.mxu0 0.0
        %2197 = vmatpush2.msra.mxu0 0.0
        %2198 = vmatprep.subr.mxu0 0.0
        %2199 = vmatpush2.msra.mxu0 0.0
        %2200 = vmatprep.subr.mxu0 0.0
        %2201 = vmatpush2.msra.mxu0 0.0
        %2202 = vmatprep.mubr.f32.mxu0 0.0
        %2203 = vmatmul.mubr.f32.gmra.mxu0 %v2129
        %v2204 = vpop.f32.mrf.mxu0
        %v2205 = vadd.f32 0.0, %v2204
        %v2206 = vpop.f32.mrf.mxu0
        %v2207 = vadd.f32 0.0, %v2206
        %2208 = vdwg.mxu0
        %v2209 = vld [vmem:[%s2] sm:$0xff]
        %2211 = vset.pattern.permute.xlu0 0
        %2212 = vperm.xlu0 %2211, %v2209
        %v2213 = vpop.permute.xlu0 %2212
        %v2215 = vmul.f32 %v2205, %v2213
        %v2216 = vmul.f32 %v2207, %v2213
        %v2217 = vld [vmem:[%s3] sm:$0xff]
        %2219 = vset.pattern.permute.xlu0 0
        %2220 = vperm.xlu0 %2219, %v2217
        %v2221 = vpop.permute.xlu0 %2220
        %v2223 = vadd.f32 %v2215, %v2221
        %v2224 = vadd.f32 %v2216, %v2221
        %v2225 = vmax.f32 %v2223, 0.0
        %v2226 = vmax.f32 %v2224, 0.0
        %2227 = vst [vmem:[%s215] sm:$0xff] %v2225
        %2228 = vst [vmem:[%s215 + $0x8] sm:$0xff] %v2226
        %s2229 = sand.u32 %s118, 1
        %s2230 = scalar_lea.sflag [#allocation4], %s2229
        %s2231 = sand.u32 %s118, 1
        %s2232 = smul.addr %s2231, 16
        %s2233 = scalar_lea.vmem [#allocation5], %s2232
        // Predicated region
        $region41: #{tpu_custom_call.1} parent=35 // pred_check
          %p2234 = pneg %p128
        $region42: #{tpu_custom_call.1} parent=35 // pred_check_branch
          %2236 = sbr.rel (%p2234) target = $region44
        $region43: #{tpu_custom_call.1} parent=35 // pred_region
          %s2238 = ssub.s32 256, 256
          %2239 = vsyncadd %s2230, %s2238
          %s2240 = smul.addr %s21, 2
          %s2241 = smul.addr %s2240, 128
          %s2242 = scalar_lea.hbm %s4, %s2241
          %s2244 = sshll.u32 %s2233, 4
          %s2245 = int_to_ptr.vmem [resolvable:$true] %s2244
          %2247 = dma.vmem_to_hbm [thread:$0]  %s2245, 256, %s2242, %s2230
        $region44: #{tpu_custom_call.1} parent=35 // pred_fallthru
          _
      $region36: #{tpu_custom_call.1} parent=5 // pred_fallthru
        _
      %p2248 = scmp.le.s32.totalorder 2, %s16
      // Predicated region
      $region45: #{tpu_custom_call.1} parent=5 // pred_check
        %p2249 = pneg %p2248
      $region46: #{tpu_custom_call.1} parent=5 // pred_check_branch
        %2251 = sbr.rel (%p2249) target = $region48
      $region47: #{tpu_custom_call.1} parent=5 // pred_region
        %s2252 = ssub.s32 %s16, 2
        // Predicated region
        $region49: #{tpu_custom_call.1} parent=47 // pred_check
          %p2253 = pneg %p134
        $region50: #{tpu_custom_call.1} parent=47 // pred_check_branch
          %2255 = sbr.rel (%p2253) target = $region52
        $region51: #{tpu_custom_call.1} parent=47 // pred_region
          %s2256 = sand.u32 %s119, 1
          %s2257 = scalar_lea.sflag [#allocation4], %s2256
          %s2258 = sand.u32 %s119, 1
          %s2259 = smul.addr %s2258, 16
          %s2260 = scalar_lea.vmem [#allocation5], %s2259
          %2261 = dma.done %s2257, 256
        $region52: #{tpu_custom_call.1} parent=47 // pred_fallthru
          _
      $region48: #{tpu_custom_call.1} parent=5 // pred_fallthru
        _
    $region6: #{tpu_custom_call.1} parent=1 // loop_footer
      %s20 = sadd.s32 1, %s16
    $region7: #{tpu_custom_call.1} parent=1 // loop_footer_branch
      %15 = sbr.rel target = $region3
    $region8: #{tpu_custom_call.1} parent=1 // loop_exit
      _
    %2262 = vsyncpa [#allocation3], 1
    %s2263 = scalar_lea.sflag [#allocation3], 1
    %2264 = vsyncpa %s2263, 1
    %2265 = vsyncpa [#allocation4], 1
    %s2266 = scalar_lea.sflag [#allocation4], 1
    %2267 = vsyncpa %s2266, 1

</llo_original>
